<compile_context>
chip_gen: v7x
topology: tpu7x:2x2x1
jax: 0.10.0
libtpu: 0.0.40
codegen_flags: <defaults>
</compile_context>

<pallas_src>
import functools

import jax
import jax.numpy as jnp
from jax.experimental import pallas as pl
from jax.experimental.pallas import tpu as pltpu

_VMEM_LIMIT_BYTES = 32 * 1024 * 1024  # safe on v5e/v6e (128 MiB) and v7x (64 MiB)


def _round_up(x, m):
    return (x + m - 1) // m * m


def _score_kernel(z_ref, w1_ref, b1_ref, w2_ref, o_ref, *,
                  n_valid, tile_n, num_heads, feat):
    """Accumulate sum_n tanh(z_m @ W1 + b1) @ w2 for every metapath m.

    z_ref  : (TILE_N, M*F)  flattened node-feature tile (lane-dense)
    w1_ref : (F, H)         first projection weight
    b1_ref : (1, H)         first projection bias
    w2_ref : (1, H)         second projection weight (no bias)
    o_ref  : (8, 128)       lane-packed per-metapath score sums for this shard
                            (resident accumulator across the node-tile axis)
    """
    t = pl.program_id(1)

    @pl.when(t == 0)
    def _():
        o_ref[...] = jnp.zeros_like(o_ref)

    # Valid-node mask as a (1, TILE_N) lane vector; it is folded into the
    # node-reduction mat-vec so no full-tile VPU masking is needed.
    node0 = (pl.program_id(0) * pl.num_programs(1) + t) * tile_n
    col = jax.lax.broadcasted_iota(jnp.int32, (1, tile_n), 1)
    vrow = (col + node0 < n_valid).astype(jnp.float32)        # (1, TILE_N)

    # Hoist weight / bias loads out of the per-metapath loop.
    w1 = w1_ref[...]
    b1 = b1_ref[...]
    w2 = w2_ref[...]
    lane = jax.lax.broadcasted_iota(jnp.int32, (8, 128), 1)

    acc = jnp.zeros((8, 128), jnp.float32)
    for p in range(num_heads):                                 # M is small & static
        zp = z_ref[:, p * feat:(p + 1) * feat]                 # (TILE_N, F) lane-aligned
        hp = jnp.tanh(
            jnp.dot(zp, w1, preferred_element_type=jnp.float32) + b1)   # (TILE_N, H)
        # masked node-sum on the MXU: (1, TILE_N) @ (TILE_N, H) -> (1, H)
        gp = jnp.dot(vrow, hp, preferred_element_type=jnp.float32)
        contrib = jnp.sum(gp * w2)                             # scalar (single vreg)
        acc = acc + jnp.where(lane == p, contrib, 0.0)
    o_ref[...] += acc


def _mix_kernel(beta_ref, z_ref, o_ref, *, num_heads, feat):
    """out_tile = sum_m beta[m] * z_tile[:, m*F:(m+1)*F].

    beta_ref : (M,) f32 in SMEM (cheap scalar reads)
    z_ref    : (TILE_N, M*F)
    o_ref    : (TILE_N, F)   lane-dense output block
    """
    acc = beta_ref[0] * z_ref[:, :feat].astype(jnp.float32)
    for p in range(1, num_heads):
        acc = acc + beta_ref[p] * z_ref[:, p * feat:(p + 1) * feat].astype(jnp.float32)
    o_ref[...] = acc.astype(o_ref.dtype)


def semantic_attention_forward(z, w1, b1, w2, *, tile_n=1024, score_shards=2):
    """z: (N, M, F); w1: (F, H); b1: (H,); w2: (H,).  Returns (N, F)."""
    n, m, f = z.shape
    h = w1.shape[1]
    mf = m * f
    assert m <= 128, "metapath count must fit in one lane register"

    # Node-tile size: big (bandwidth) but capped to the (8-aligned) node count.
    tile_n = _round_up(min(tile_n, _round_up(n, 8)), 8)

    num_tiles = pl.cdiv(n, tile_n)
    # Leading 'parallel' shard axis for the score reduction (2 TCs on v7x;
    # harmless serial axis on v5e/v6e).
    shards = max(1, min(score_shards, num_tiles))
    tiles_per_shard = pl.cdiv(num_tiles, shards)
    n_pad = shards * tiles_per_shard * tile_n

    # Free view: (N, M, F) -> (N, M*F). No HBM transpose, no sublane padding.
    z_flat = z.reshape(n, mf)
    if n_pad != n:
        z_flat = jnp.pad(z_flat, ((0, n_pad - n), (0, 0)))

    compiler_params = pltpu.CompilerParams(
        dimension_semantics=("parallel", "arbitrary"),
        vmem_limit_bytes=_VMEM_LIMIT_BYTES)

    # ---- pass 1: per-metapath summed projection scores (node reduction) ----
    score_part = pl.pallas_call(
        functools.partial(_score_kernel, n_valid=n, tile_n=tile_n,
                          num_heads=m, feat=f),
        out_shape=jax.ShapeDtypeStruct((shards, 8, 128), jnp.float32),
        grid_spec=pltpu.PrefetchScalarGridSpec(
            num_scalar_prefetch=0,
            grid=(shards, tiles_per_shard),
            in_specs=[
                pl.BlockSpec((tile_n, mf),
                             lambda c, t: (c * tiles_per_shard + t, 0)),
                pl.BlockSpec((f, h), lambda c, t: (0, 0)),
                pl.BlockSpec((1, h), lambda c, t: (0, 0)),
                pl.BlockSpec((1, h), lambda c, t: (0, 0)),
            ],
            out_specs=pl.BlockSpec((None, 8, 128), lambda c, t: (c, 0, 0)),
        ),
        compiler_params=compiler_params,
    )(z_flat, w1, b1.reshape(1, h), w2.reshape(1, h))

    # ---- tiny (M-element) softmax between the two kernels: plain JAX ----
    w_mean = score_part[:, 0, :m].sum(axis=0) / n              # (M,)
    beta = jax.nn.softmax(w_mean).astype(jnp.float32)          # (M,)

    # ---- pass 2: beta-weighted sum over metapaths (fully parallel) ----
    out = pl.pallas_call(
        functools.partial(_mix_kernel, num_heads=m, feat=f),
        out_shape=jax.ShapeDtypeStruct((n_pad, f), z.dtype),
        grid_spec=pltpu.PrefetchScalarGridSpec(
            num_scalar_prefetch=0,
            grid=(n_pad // tile_n,),
            in_specs=[
                pl.BlockSpec(memory_space=pltpu.MemorySpace.SMEM),
                pl.BlockSpec((tile_n, mf), lambda i: (i, 0)),
            ],
            out_specs=pl.BlockSpec((tile_n, f), lambda i: (i, 0)),
        ),
        compiler_params=pltpu.CompilerParams(
            dimension_semantics=("parallel",),
            vmem_limit_bytes=_VMEM_LIMIT_BYTES),
    )(beta, z_flat)
    return out[:n]


if __name__ == "__main__":
    key = jax.random.PRNGKey(0)
    # N nodes, M metapaths, F in_feats, H hidden (module default hidden_size=128)
    N, M, F, H = 250, 4, 128, 128
    k_z, k_w1, k_b1, k_w2 = jax.random.split(key, 4)

    z = jax.random.normal(k_z, (N, M, F), dtype=jnp.float32)
    # Linear(F, H) stored transposed as (F, H); Linear(H, 1, bias=False) as (H,)
    w1 = (2.0 / (F + H)) ** 0.5 * jax.random.normal(k_w1, (F, H), dtype=jnp.float32)
    b1 = 0.1 * jax.random.normal(k_b1, (H,), dtype=jnp.float32)
    w2 = (2.0 / (H + 1)) ** 0.5 * jax.random.normal(k_w2, (H,), dtype=jnp.float32)

    fwd = jax.jit(semantic_attention_forward)
    out = fwd(z, w1, b1, w2)
    jax.block_until_ready(out)

    # pure-JAX reference of the PyTorch forward
    def ref(z, w1, b1, w2):
        s = jnp.tanh(z @ w1 + b1) @ w2           # (N, M)
        beta = jax.nn.softmax(s.mean(axis=0))    # (M,)
        return jnp.einsum("m,nmf->nf", beta, z)  # (N, F)

    expect = ref(z, w1, b1, w2)
    assert out.shape == (N, F)
    err = float(jnp.max(jnp.abs(out - expect)))
    assert jnp.allclose(out, expect, atol=1e-3, rtol=1e-3), err

    print("KERNEL_OK")
</pallas_src>

<mosaic_0001>
module attributes {stable_mosaic.version = 11 : i64} {
  func.func @_score_kernel(%arg0: i32, %arg1: i32, %arg2: memref<256x512xf32, #tpu.memory_space<vmem>>, %arg3: memref<128x128xf32, #tpu.memory_space<vmem>>, %arg4: memref<1x128xf32, #tpu.memory_space<vmem>>, %arg5: memref<1x128xf32, #tpu.memory_space<vmem>>, %arg6: memref<1x8x128xf32, #tpu.memory_space<vmem>>) attributes {dimension_semantics = [#tpu.dimension_semantics<parallel>, #tpu.dimension_semantics<arbitrary>], iteration_bounds = array<i64: 1, 1>, scalar_prefetch = 0 : i64, scratch_operands = 0 : i64, tpu.core_type = #tpu.core_type<tc>, window_params = [{transform_indices = @transform_0, window_bounds = array<i64: 256, 512>}, {pipeline_mode = #tpu.pipeline_mode<synchronous>, transform_indices = @transform_1, window_bounds = array<i64: 128, 128>}, {pipeline_mode = #tpu.pipeline_mode<synchronous>, transform_indices = @transform_2, window_bounds = array<i64: 1, 128>}, {pipeline_mode = #tpu.pipeline_mode<synchronous>, transform_indices = @transform_3, window_bounds = array<i64: 1, 128>}, {transform_indices = @transform_4, window_bounds = array<i64: 1, 8, 128>}]} {
    %c0_i32 = arith.constant 0 : i32
    %0 = arith.cmpi eq, %arg1, %c0_i32 : i32
    %1 = arith.extui %0 : i1 to i32
    %c0_i32_0 = arith.constant 0 : i32
    %2 = arith.cmpi ne, %1, %c0_i32_0 : i32
    scf.if %2 {
      %cst_35 = arith.constant 0.000000e+00 : f32
      %92 = vector.broadcast %cst_35 : f32 to vector<8x128xf32>
      %c0_36 = arith.constant 0 : index
      %c0_37 = arith.constant 0 : index
      %c0_38 = arith.constant 0 : index
      %93 = vector.load %arg6[%c0_36, %c0_37, %c0_38] : memref<1x8x128xf32, #tpu.memory_space<vmem>>, vector<1x8x128xf32>
      %94 = vector.shape_cast %93 : vector<1x8x128xf32> to vector<8x128xf32>
      %95 = vector.shape_cast %92 : vector<8x128xf32> to vector<1x8x128xf32>
      tpu.vector_store %arg6[%c0_36, %c0_37, %c0_38], %95 {strides = array<i32>} : memref<1x8x128xf32, #tpu.memory_space<vmem>>, vector<1x8x128xf32>,
    } else {
    }
    %c1_i32 = arith.constant 1 : i32
    %3 = arith.muli %arg0, %c1_i32 : i32
    %4 = arith.addi %3, %arg1 : i32
    %c256_i32 = arith.constant 256 : i32
    %5 = arith.muli %4, %c256_i32 : i32
    %6 = tpu.iota {dimensions = array<i32: 1>} : vector<1x256xi32>
    %7 = vector.broadcast %5 : i32 to vector<1x256xi32>
    %8 = arith.addi %6, %7 : vector<1x256xi32>
    %c250_i32 = arith.constant 250 : i32
    %9 = vector.broadcast %c250_i32 : i32 to vector<1x256xi32>
    %10 = arith.cmpi slt, %8, %9 : vector<1x256xi32>
    %11 = arith.extui %10 : vector<1x256xi1> to vector<1x256xi32>
    %12 = arith.sitofp %11 : vector<1x256xi32> to vector<1x256xf32>
    %c0 = arith.constant 0 : index
    %c0_1 = arith.constant 0 : index
    %13 = vector.load %arg3[%c0, %c0_1] : memref<128x128xf32, #tpu.memory_space<vmem>>, vector<128x128xf32>
    %c0_2 = arith.constant 0 : index
    %c0_3 = arith.constant 0 : index
    %14 = vector.load %arg4[%c0_2, %c0_3] : memref<1x128xf32, #tpu.memory_space<vmem>>, vector<1x128xf32>
    %c0_4 = arith.constant 0 : index
    %c0_5 = arith.constant 0 : index
    %15 = vector.load %arg5[%c0_4, %c0_5] : memref<1x128xf32, #tpu.memory_space<vmem>>, vector<1x128xf32>
    %16 = tpu.iota {dimensions = array<i32: 1>} : vector<8x128xi32>
    %cst = arith.constant 0.000000e+00 : f32
    %17 = vector.broadcast %cst : f32 to vector<8x128xf32>
    %c0_6 = arith.constant 0 : index
    %c0_7 = arith.constant 0 : index
    %18 = vector.load %arg2[%c0_6, %c0_7] : memref<256x512xf32, #tpu.memory_space<vmem>>, vector<256x128xf32>
    %cst_8 = arith.constant dense<0.000000e+00> : vector<256x128xf32>
    %19 = tpu.matmul %18, %13, %cst_8 {dimension_numbers = #tpu.dot_dimension_numbers<[1], [0], [0], [1], [0, 0, 1, 1], [], []>} : vector<256x128xf32>, vector<128x128xf32>, vector<256x128xf32> -> vector<256x128xf32>
    %20 = vector.broadcast %14 : vector<1x128xf32> to vector<256x128xf32>
    %21 = arith.addf %19, %20 : vector<256x128xf32>
    %22 = math.tanh %21 : vector<256x128xf32>
    %cst_9 = arith.constant dense<0.000000e+00> : vector<1x128xf32>
    %23 = tpu.matmul %12, %22, %cst_9 {dimension_numbers = #tpu.dot_dimension_numbers<[1], [0], [0], [1], [0, 0, 1, 1], [], []>} : vector<1x256xf32>, vector<256x128xf32>, vector<1x128xf32> -> vector<1x128xf32>
    %24 = arith.mulf %23, %15 : vector<1x128xf32>
    %25 = vector.shape_cast %24 : vector<1x128xf32> to vector<1x1x128xf32>
    %cst_10 = arith.constant dense<0.000000e+00> : vector<1xf32>
    %26 = vector.multi_reduction <add>, %25, %cst_10 [1, 2] : vector<1x1x128xf32> to vector<1xf32>
    %27 = vector.shape_cast %26 : vector<1xf32> to vector<1x1x1xf32>
    %28 = vector.extract %27[0, 0, 0] : f32 from vector<1x1x1xf32>
    %c0_i32_11 = arith.constant 0 : i32
    %29 = vector.broadcast %c0_i32_11 : i32 to vector<8x128xi32>
    %30 = arith.cmpi eq, %16, %29 : vector<8x128xi32>
    %cst_12 = arith.constant 0.000000e+00 : f32
    %31 = vector.broadcast %28 : f32 to vector<8x128xf32>
    %32 = vector.broadcast %cst_12 : f32 to vector<8x128xf32>
    %33 = arith.select %30, %31, %32 : vector<8x128xi1>, vector<8x128xf32>
    %34 = arith.addf %17, %33 : vector<8x128xf32>
    %c0_13 = arith.constant 0 : index
    %c128 = arith.constant 128 : index
    %35 = vector.load %arg2[%c0_13, %c128] : memref<256x512xf32, #tpu.memory_space<vmem>>, vector<256x128xf32>
    %cst_14 = arith.constant dense<0.000000e+00> : vector<256x128xf32>
    %36 = tpu.matmul %35, %13, %cst_14 {dimension_numbers = #tpu.dot_dimension_numbers<[1], [0], [0], [1], [0, 0, 1, 1], [], []>} : vector<256x128xf32>, vector<128x128xf32>, vector<256x128xf32> -> vector<256x128xf32>
    %37 = vector.broadcast %14 : vector<1x128xf32> to vector<256x128xf32>
    %38 = arith.addf %36, %37 : vector<256x128xf32>
    %39 = math.tanh %38 : vector<256x128xf32>
    %cst_15 = arith.constant dense<0.000000e+00> : vector<1x128xf32>
    %40 = tpu.matmul %12, %39, %cst_15 {dimension_numbers = #tpu.dot_dimension_numbers<[1], [0], [0], [1], [0, 0, 1, 1], [], []>} : vector<1x256xf32>, vector<256x128xf32>, vector<1x128xf32> -> vector<1x128xf32>
    %41 = arith.mulf %40, %15 : vector<1x128xf32>
    %42 = vector.shape_cast %41 : vector<1x128xf32> to vector<1x1x128xf32>
    %cst_16 = arith.constant dense<0.000000e+00> : vector<1xf32>
    %43 = vector.multi_reduction <add>, %42, %cst_16 [1, 2] : vector<1x1x128xf32> to vector<1xf32>
    %44 = vector.shape_cast %43 : vector<1xf32> to vector<1x1x1xf32>
    %45 = vector.extract %44[0, 0, 0] : f32 from vector<1x1x1xf32>
    %c1_i32_17 = arith.constant 1 : i32
    %46 = vector.broadcast %c1_i32_17 : i32 to vector<8x128xi32>
    %47 = arith.cmpi eq, %16, %46 : vector<8x128xi32>
    %cst_18 = arith.constant 0.000000e+00 : f32
    %48 = vector.broadcast %45 : f32 to vector<8x128xf32>
    %49 = vector.broadcast %cst_18 : f32 to vector<8x128xf32>
    %50 = arith.select %47, %48, %49 : vector<8x128xi1>, vector<8x128xf32>
    %51 = arith.addf %34, %50 : vector<8x128xf32>
    %c0_19 = arith.constant 0 : index
    %c256 = arith.constant 256 : index
    %52 = vector.load %arg2[%c0_19, %c256] : memref<256x512xf32, #tpu.memory_space<vmem>>, vector<256x128xf32>
    %cst_20 = arith.constant dense<0.000000e+00> : vector<256x128xf32>
    %53 = tpu.matmul %52, %13, %cst_20 {dimension_numbers = #tpu.dot_dimension_numbers<[1], [0], [0], [1], [0, 0, 1, 1], [], []>} : vector<256x128xf32>, vector<128x128xf32>, vector<256x128xf32> -> vector<256x128xf32>
    %54 = vector.broadcast %14 : vector<1x128xf32> to vector<256x128xf32>
    %55 = arith.addf %53, %54 : vector<256x128xf32>
    %56 = math.tanh %55 : vector<256x128xf32>
    %cst_21 = arith.constant dense<0.000000e+00> : vector<1x128xf32>
    %57 = tpu.matmul %12, %56, %cst_21 {dimension_numbers = #tpu.dot_dimension_numbers<[1], [0], [0], [1], [0, 0, 1, 1], [], []>} : vector<1x256xf32>, vector<256x128xf32>, vector<1x128xf32> -> vector<1x128xf32>
    %58 = arith.mulf %57, %15 : vector<1x128xf32>
    %59 = vector.shape_cast %58 : vector<1x128xf32> to vector<1x1x128xf32>
    %cst_22 = arith.constant dense<0.000000e+00> : vector<1xf32>
    %60 = vector.multi_reduction <add>, %59, %cst_22 [1, 2] : vector<1x1x128xf32> to vector<1xf32>
    %61 = vector.shape_cast %60 : vector<1xf32> to vector<1x1x1xf32>
    %62 = vector.extract %61[0, 0, 0] : f32 from vector<1x1x1xf32>
    %c2_i32 = arith.constant 2 : i32
    %63 = vector.broadcast %c2_i32 : i32 to vector<8x128xi32>
    %64 = arith.cmpi eq, %16, %63 : vector<8x128xi32>
    %cst_23 = arith.constant 0.000000e+00 : f32
    %65 = vector.broadcast %62 : f32 to vector<8x128xf32>
    %66 = vector.broadcast %cst_23 : f32 to vector<8x128xf32>
    %67 = arith.select %64, %65, %66 : vector<8x128xi1>, vector<8x128xf32>
    %68 = arith.addf %51, %67 : vector<8x128xf32>
    %c0_24 = arith.constant 0 : index
    %c384 = arith.constant 384 : index
    %69 = vector.load %arg2[%c0_24, %c384] : memref<256x512xf32, #tpu.memory_space<vmem>>, vector<256x128xf32>
    %cst_25 = arith.constant dense<0.000000e+00> : vector<256x128xf32>
    %70 = tpu.matmul %69, %13, %cst_25 {dimension_numbers = #tpu.dot_dimension_numbers<[1], [0], [0], [1], [0, 0, 1, 1], [], []>} : vector<256x128xf32>, vector<128x128xf32>, vector<256x128xf32> -> vector<256x128xf32>
    %71 = vector.broadcast %14 : vector<1x128xf32> to vector<256x128xf32>
    %72 = arith.addf %70, %71 : vector<256x128xf32>
    %73 = math.tanh %72 : vector<256x128xf32>
    %cst_26 = arith.constant dense<0.000000e+00> : vector<1x128xf32>
    %74 = tpu.matmul %12, %73, %cst_26 {dimension_numbers = #tpu.dot_dimension_numbers<[1], [0], [0], [1], [0, 0, 1, 1], [], []>} : vector<1x256xf32>, vector<256x128xf32>, vector<1x128xf32> -> vector<1x128xf32>
    %75 = arith.mulf %74, %15 : vector<1x128xf32>
    %76 = vector.shape_cast %75 : vector<1x128xf32> to vector<1x1x128xf32>
    %cst_27 = arith.constant dense<0.000000e+00> : vector<1xf32>
    %77 = vector.multi_reduction <add>, %76, %cst_27 [1, 2] : vector<1x1x128xf32> to vector<1xf32>
    %78 = vector.shape_cast %77 : vector<1xf32> to vector<1x1x1xf32>
    %79 = vector.extract %78[0, 0, 0] : f32 from vector<1x1x1xf32>
    %c3_i32 = arith.constant 3 : i32
    %80 = vector.broadcast %c3_i32 : i32 to vector<8x128xi32>
    %81 = arith.cmpi eq, %16, %80 : vector<8x128xi32>
    %cst_28 = arith.constant 0.000000e+00 : f32
    %82 = vector.broadcast %79 : f32 to vector<8x128xf32>
    %83 = vector.broadcast %cst_28 : f32 to vector<8x128xf32>
    %84 = arith.select %81, %82, %83 : vector<8x128xi1>, vector<8x128xf32>
    %85 = arith.addf %68, %84 : vector<8x128xf32>
    %c0_29 = arith.constant 0 : index
    %c0_30 = arith.constant 0 : index
    %c0_31 = arith.constant 0 : index
    %86 = vector.load %arg6[%c0_29, %c0_30, %c0_31] : memref<1x8x128xf32, #tpu.memory_space<vmem>>, vector<1x8x128xf32>
    %87 = vector.shape_cast %86 : vector<1x8x128xf32> to vector<8x128xf32>
    %88 = arith.addf %87, %85 : vector<8x128xf32>
    %c0_32 = arith.constant 0 : index
    %c0_33 = arith.constant 0 : index
    %c0_34 = arith.constant 0 : index
    %89 = vector.load %arg6[%c0_32, %c0_33, %c0_34] : memref<1x8x128xf32, #tpu.memory_space<vmem>>, vector<1x8x128xf32>
    %90 = vector.shape_cast %89 : vector<1x8x128xf32> to vector<8x128xf32>
    %91 = vector.shape_cast %88 : vector<8x128xf32> to vector<1x8x128xf32>
    tpu.vector_store %arg6[%c0_32, %c0_33, %c0_34], %91 {strides = array<i32>} : memref<1x8x128xf32, #tpu.memory_space<vmem>>, vector<1x8x128xf32>,
    return
  }
  func.func @transform_0(%arg0: i32, %arg1: i32) -> (i32, i32) {
    %c1_i32 = arith.constant 1 : i32
    %0 = arith.muli %arg0, %c1_i32 : i32
    %1 = arith.addi %0, %arg1 : i32
    %c0_i32 = arith.constant 0 : i32
    %c0_i32_0 = arith.constant 0 : i32
    return %1, %c0_i32 : i32, i32
  }
  func.func @transform_1(%arg0: i32, %arg1: i32) -> (i32, i32) {
    %c0_i32 = arith.constant 0 : i32
    %c0_i32_0 = arith.constant 0 : i32
    %c0_i32_1 = arith.constant 0 : i32
    return %c0_i32, %c0_i32_0 : i32, i32
  }
  func.func @transform_2(%arg0: i32, %arg1: i32) -> (i32, i32) {
    %c0_i32 = arith.constant 0 : i32
    %c0_i32_0 = arith.constant 0 : i32
    %c0_i32_1 = arith.constant 0 : i32
    return %c0_i32, %c0_i32_0 : i32, i32
  }
  func.func @transform_3(%arg0: i32, %arg1: i32) -> (i32, i32) {
    %c0_i32 = arith.constant 0 : i32
    %c0_i32_0 = arith.constant 0 : i32
    %c0_i32_1 = arith.constant 0 : i32
    return %c0_i32, %c0_i32_0 : i32, i32
  }
  func.func @transform_4(%arg0: i32, %arg1: i32) -> (i32, i32, i32) {
    %c0_i32 = arith.constant 0 : i32
    %c0_i32_0 = arith.constant 0 : i32
    %c0_i32_1 = arith.constant 0 : i32
    return %arg0, %c0_i32, %c0_i32_0 : i32, i32, i32
  }
}

module attributes {stable_mosaic.version = 11 : i64} {
  func.func @_mix_kernel(%arg0: i32, %arg1: memref<4xf32, #tpu.memory_space<smem>>, %arg2: memref<256x512xf32, #tpu.memory_space<vmem>>, %arg3: memref<256x128xf32, #tpu.memory_space<vmem>>) attributes {dimension_semantics = [#tpu.dimension_semantics<parallel>], iteration_bounds = array<i64: 1>, scalar_prefetch = 0 : i64, scratch_operands = 0 : i64, tpu.core_type = #tpu.core_type<tc>, window_params = [{transform_indices = @transform_0, window_bounds = array<i64: 4>}, {transform_indices = @transform_1, window_bounds = array<i64: 256, 512>}, {transform_indices = @transform_2, window_bounds = array<i64: 256, 128>}]} {
    %c0 = arith.constant 0 : index
    %0 = memref.load %arg1[%c0] : memref<4xf32, #tpu.memory_space<smem>>
    %c0_0 = arith.constant 0 : index
    %c0_1 = arith.constant 0 : index
    %1 = vector.load %arg2[%c0_0, %c0_1] : memref<256x512xf32, #tpu.memory_space<vmem>>, vector<256x128xf32>
    %2 = vector.broadcast %0 : f32 to vector<256x128xf32>
    %3 = arith.mulf %2, %1 : vector<256x128xf32>
    %c1 = arith.constant 1 : index
    %4 = memref.load %arg1[%c1] : memref<4xf32, #tpu.memory_space<smem>>
    %c0_2 = arith.constant 0 : index
    %c128 = arith.constant 128 : index
    %5 = vector.load %arg2[%c0_2, %c128] : memref<256x512xf32, #tpu.memory_space<vmem>>, vector<256x128xf32>
    %6 = vector.broadcast %4 : f32 to vector<256x128xf32>
    %7 = arith.mulf %6, %5 : vector<256x128xf32>
    %8 = arith.addf %3, %7 : vector<256x128xf32>
    %c2 = arith.constant 2 : index
    %9 = memref.load %arg1[%c2] : memref<4xf32, #tpu.memory_space<smem>>
    %c0_3 = arith.constant 0 : index
    %c256 = arith.constant 256 : index
    %10 = vector.load %arg2[%c0_3, %c256] : memref<256x512xf32, #tpu.memory_space<vmem>>, vector<256x128xf32>
    %11 = vector.broadcast %9 : f32 to vector<256x128xf32>
    %12 = arith.mulf %11, %10 : vector<256x128xf32>
    %13 = arith.addf %8, %12 : vector<256x128xf32>
    %c3 = arith.constant 3 : index
    %14 = memref.load %arg1[%c3] : memref<4xf32, #tpu.memory_space<smem>>
    %c0_4 = arith.constant 0 : index
    %c384 = arith.constant 384 : index
    %15 = vector.load %arg2[%c0_4, %c384] : memref<256x512xf32, #tpu.memory_space<vmem>>, vector<256x128xf32>
    %16 = vector.broadcast %14 : f32 to vector<256x128xf32>
    %17 = arith.mulf %16, %15 : vector<256x128xf32>
    %18 = arith.addf %13, %17 : vector<256x128xf32>
    %c0_5 = arith.constant 0 : index
    %c0_6 = arith.constant 0 : index
    %19 = vector.load %arg3[%c0_5, %c0_6] : memref<256x128xf32, #tpu.memory_space<vmem>>, vector<256x128xf32>
    tpu.vector_store %arg3[%c0_5, %c0_6], %18 {strides = array<i32>} : memref<256x128xf32, #tpu.memory_space<vmem>>, vector<256x128xf32>,
    return
  }
  func.func @transform_0(%arg0: i32) -> i32 {
    %c0_i32 = arith.constant 0 : i32
    %c0_i32_0 = arith.constant 0 : i32
    return %c0_i32 : i32
  }
  func.func @transform_1(%arg0: i32) -> (i32, i32) {
    %c0_i32 = arith.constant 0 : i32
    %c0_i32_0 = arith.constant 0 : i32
    return %arg0, %c0_i32 : i32, i32
  }
  func.func @transform_2(%arg0: i32) -> (i32, i32) {
    %c0_i32 = arith.constant 0 : i32
    %c0_i32_0 = arith.constant 0 : i32
    return %arg0, %c0_i32 : i32, i32
  }
}

</mosaic_0001>

<llo_original>
// kernel: semantic_attention_forward.2
$region0: #{semantic_attention_forward.2}
  #allocation0 [shape = 'u32[]', space=smem, size = 0x4, offset = 0x4, fixed_abs, tag = 'smem constant byte address 0x4 - core index']
  #allocation1 [shape = 'u32[144,128]{1,0:T(1,128)}', space=vmem, size = 0x12000, scoped, tag = 'internal scratch']
  %s0 = inlined_call_operand.vmem [shape: f32[256,512], index: 0, kind: input, shape index: {}]
  %s1 = inlined_call_operand.vmem [shape: f32[128,128], index: 1, kind: input, shape index: {}]
  %s2 = inlined_call_operand.vmem [shape: f32[1,128], index: 2, kind: input, shape index: {}]
  %s3 = inlined_call_operand.vmem [shape: f32[1,128], index: 3, kind: input, shape index: {}]
  %s4 = inlined_call_operand.vmem [shape: f32[1,8,128], index: 4, kind: output, shape index: {}]
  %s5 = sld [smem:[#allocation0]]
  $region30: #{semantic_attention_forward.2} parent=0
    _
  %s7 = ssub.s32 1, %s5
  %s8 = scalar_select 0, %s7, %s5
  // Predicated region
  $region2: #{semantic_attention_forward.2} parent=0 // pred_check
    _
  $region3: #{semantic_attention_forward.2} parent=0 // pred_check_branch
    %10 = sbr.rel (0) target = $region5
  $region4: #{semantic_attention_forward.2} parent=0 // pred_region
    %s11 = sadd.s32 0, 0
    %s12 = smul.u32 32, %s11
    %p13 = scmp.lt.s32.totalorder %s12, 31
    %s14 = scalar_select %p13, %s12, 31
    %s15 = smul.addr %s14, 4
    %s16 = smul.addr %s15, 8
    %s17 = scalar_lea.vmem %s0, %s16
    %s18 = sadd.s32 0, 0
    %s19 = smul.u32 32, %s18
  $region5: #{semantic_attention_forward.2} parent=0 // pred_fallthru
    _
  // Predicated region
  $region6: #{semantic_attention_forward.2} parent=0 // pred_check
    _
  $region7: #{semantic_attention_forward.2} parent=0 // pred_check_branch
    %21 = sbr.rel (0) target = $region9
  $region8: #{semantic_attention_forward.2} parent=0 // pred_region
    _
  $region9: #{semantic_attention_forward.2} parent=0 // pred_fallthru
    _
  // Predicated region
  $region10: #{semantic_attention_forward.2} parent=0 // pred_check
    _
  $region11: #{semantic_attention_forward.2} parent=0 // pred_check_branch
    %23 = sbr.rel (0) target = $region13
  $region12: #{semantic_attention_forward.2} parent=0 // pred_region
    _
  $region13: #{semantic_attention_forward.2} parent=0 // pred_fallthru
    _
  // Predicated region
  $region14: #{semantic_attention_forward.2} parent=0 // pred_check
    _
  $region15: #{semantic_attention_forward.2} parent=0 // pred_check_branch
    %25 = sbr.rel (0) target = $region17
  $region16: #{semantic_attention_forward.2} parent=0 // pred_region
    _
  $region17: #{semantic_attention_forward.2} parent=0 // pred_fallthru
    _
  %s26 = sadd.s32 0, 0
  %s27 = smul.u32 32, %s26
  %p28 = scmp.lt.s32.totalorder %s27, 31
  %s29 = scalar_select %p28, %s27, 31
  %s30 = smul.addr %s29, 4
  %s31 = smul.addr %s30, 8
  %s32 = scalar_lea.vmem %s0, %s31
  %s33 = sadd.s32 0, 0
  %s34 = smul.u32 32, %s33
  %p35 = scmp.lt.s32.totalorder %s34, 31
  %s36 = scalar_select %p35, %s34, 31
  %s37 = smul.addr %s36, 4
  %s38 = smul.addr %s37, 8
  %s39 = scalar_lea.vmem %s0, %s38
  %s40 = sadd.s32 0, 0
  %s41 = smul.u32 32, %s40
  %p42 = scmp.eq.s32.totalorder 0, 0
  // Predicated region
  $region18: #{semantic_attention_forward.2} parent=0 // pred_check
    %p43 = pneg %p42
  $region19: #{semantic_attention_forward.2} parent=0 // pred_check_branch
    %45 = sbr.rel (%p43) target = $region21
  $region20: #{semantic_attention_forward.2} parent=0 // pred_region
    %46 = vst [vmem:[%s4] sm:$0xff] 0.0
  $region21: #{semantic_attention_forward.2} parent=0 // pred_fallthru
    _
  %s47 = sadd.s32 0, 0
  %s48 = smul.u32 %s47, 256
  %v49 = vlaneseq
  %v50 = vand.u32 %v49, 127
  %v51 = vadd.s32 %v50, 128
  %v52 = vstv %s48
  %v53 = vadd.s32 %v50, %v52
  %v54 = vadd.s32 %v51, %v52
  %vm55 = vcmp.lt.s32.totalorder %v53, 250
  %vm56 = vcmp.lt.s32.totalorder %v54, 250
  %v57 = vsel %vm55, 1, 0
  %v58 = vsel %vm56, 1, 0
  %v59 = vcvt.s32.f32 %v57
  %v60 = vcvt.s32.f32 %v58
  %v61 = vld [vmem:[%s1] sm:$0xff]
  %v62 = vld [vmem:[%s1 + $0x8] sm:$0xff]
  %v63 = vld [vmem:[%s1 + $0x10] sm:$0xff]
  %v64 = vld [vmem:[%s1 + $0x18] sm:$0xff]
  %v65 = vld [vmem:[%s1 + $0x20] sm:$0xff]
  %v66 = vld [vmem:[%s1 + $0x28] sm:$0xff]
  %v67 = vld [vmem:[%s1 + $0x30] sm:$0xff]
  %v68 = vld [vmem:[%s1 + $0x38] sm:$0xff]
  %v69 = vld [vmem:[%s1 + $0x40] sm:$0xff]
  %v70 = vld [vmem:[%s1 + $0x48] sm:$0xff]
  %v71 = vld [vmem:[%s1 + $0x50] sm:$0xff]
  %v72 = vld [vmem:[%s1 + $0x58] sm:$0xff]
  %v73 = vld [vmem:[%s1 + $0x60] sm:$0xff]
  %v74 = vld [vmem:[%s1 + $0x68] sm:$0xff]
  %v75 = vld [vmem:[%s1 + $0x70] sm:$0xff]
  %v76 = vld [vmem:[%s1 + $0x78] sm:$0xff]
  %v77 = vld [vmem:[%s2] sm:$0x1]
  %v78 = vld [vmem:[%s3] sm:$0x1]
  %v79 = vld [vmem:[%s39] sm:$0xff]
  %v80 = vld [vmem:[%s39 + $0x20] sm:$0xff]
  %v81 = vld [vmem:[%s39 + $0x40] sm:$0xff]
  %v82 = vld [vmem:[%s39 + $0x60] sm:$0xff]
  %v83 = vld [vmem:[%s39 + $0x80] sm:$0xff]
  %v84 = vld [vmem:[%s39 + $0xa0] sm:$0xff]
  %v85 = vld [vmem:[%s39 + $0xc0] sm:$0xff]
  %v86 = vld [vmem:[%s39 + $0xe0] sm:$0xff]
  %v87 = vld [vmem:[%s39 + $0x100] sm:$0xff]
  %v88 = vld [vmem:[%s39 + $0x120] sm:$0xff]
  %v89 = vld [vmem:[%s39 + $0x140] sm:$0xff]
  %v90 = vld [vmem:[%s39 + $0x160] sm:$0xff]
  %v91 = vld [vmem:[%s39 + $0x180] sm:$0xff]
  %v92 = vld [vmem:[%s39 + $0x1a0] sm:$0xff]
  %v93 = vld [vmem:[%s39 + $0x1c0] sm:$0xff]
  %v94 = vld [vmem:[%s39 + $0x1e0] sm:$0xff]
  %v95 = vld [vmem:[%s39 + $0x200] sm:$0xff]
  %v96 = vld [vmem:[%s39 + $0x220] sm:$0xff]
  %v97 = vld [vmem:[%s39 + $0x240] sm:$0xff]
  %v98 = vld [vmem:[%s39 + $0x260] sm:$0xff]
  %v99 = vld [vmem:[%s39 + $0x280] sm:$0xff]
  %v100 = vld [vmem:[%s39 + $0x2a0] sm:$0xff]
  %v101 = vld [vmem:[%s39 + $0x2c0] sm:$0xff]
  %v102 = vld [vmem:[%s39 + $0x2e0] sm:$0xff]
  %v103 = vld [vmem:[%s39 + $0x300] sm:$0xff]
  %v104 = vld [vmem:[%s39 + $0x320] sm:$0xff]
  %v105 = vld [vmem:[%s39 + $0x340] sm:$0xff]
  %v106 = vld [vmem:[%s39 + $0x360] sm:$0xff]
  %v107 = vld [vmem:[%s39 + $0x380] sm:$0xff]
  %v108 = vld [vmem:[%s39 + $0x3a0] sm:$0xff]
  %v109 = vld [vmem:[%s39 + $0x3c0] sm:$0xff]
  %v110 = vld [vmem:[%s39 + $0x3e0] sm:$0xff]
  %v112 = vlaneseq
  %v113 = vshrl.u32 %v112, 7
  %v114 = vsub.s32 0, %v113
  %v115 = vrot.slane %v77, %v114
  %117 = vmatprep.subr.mxu0 0.0
  %118 = vmatpush1.msra.mxu0 %v61
  %119 = vmatprep.subr.mxu0 0.0
  %120 = vmatpush1.msra.mxu0 %v62
  %121 = vmatprep.subr.mxu0 0.0
  %122 = vmatpush1.msra.mxu0 %v63
  %123 = vmatprep.subr.mxu0 0.0
  %124 = vmatpush1.msra.mxu0 %v64
  %125 = vmatprep.subr.mxu0 0.0
  %126 = vmatpush1.msra.mxu0 %v65
  %127 = vmatprep.subr.mxu0 0.0
  %128 = vmatpush1.msra.mxu0 %v66
  %129 = vmatprep.subr.mxu0 0.0
  %130 = vmatpush1.msra.mxu0 %v67
  %131 = vmatprep.subr.mxu0 0.0
  %132 = vmatpush1.msra.mxu0 %v68
  %133 = vmatprep.subr.mxu0 0.0
  %134 = vmatpush1.msra.mxu0 %v69
  %135 = vmatprep.subr.mxu0 0.0
  %136 = vmatpush1.msra.mxu0 %v70
  %137 = vmatprep.subr.mxu0 0.0
  %138 = vmatpush1.msra.mxu0 %v71
  %139 = vmatprep.subr.mxu0 0.0
  %140 = vmatpush1.msra.mxu0 %v72
  %141 = vmatprep.subr.mxu0 0.0
  %142 = vmatpush1.msra.mxu0 %v73
  %143 = vmatprep.subr.mxu0 0.0
  %144 = vmatpush1.msra.mxu0 %v74
  %145 = vmatprep.subr.mxu0 0.0
  %146 = vmatpush1.msra.mxu0 %v75
  %147 = vmatprep.subr.mxu0 0.0
  %148 = vmatpush1.msra.mxu0 %v76
  %149 = vmatprep.subr.mxu0 0.0
  %150 = vmatpush1.msra.mxu0 0.0
  %151 = vmatprep.subr.mxu0 0.0
  %152 = vmatpush1.msra.mxu0 0.0
  %153 = vmatprep.subr.mxu0 0.0
  %154 = vmatpush1.msra.mxu0 0.0
  %155 = vmatprep.subr.mxu0 0.0
  %156 = vmatpush1.msra.mxu0 0.0
  %157 = vmatprep.subr.mxu0 0.0
  %158 = vmatpush1.msra.mxu0 0.0
  %159 = vmatprep.subr.mxu0 0.0
  %160 = vmatpush1.msra.mxu0 0.0
  %161 = vmatprep.subr.mxu0 0.0
  %162 = vmatpush1.msra.mxu0 0.0
  %163 = vmatprep.subr.mxu0 0.0
  %164 = vmatpush1.msra.mxu0 0.0
  %165 = vmatprep.subr.mxu0 0.0
  %166 = vmatpush1.msra.mxu0 0.0
  %167 = vmatprep.subr.mxu0 0.0
  %168 = vmatpush1.msra.mxu0 0.0
  %169 = vmatprep.subr.mxu0 0.0
  %170 = vmatpush1.msra.mxu0 0.0
  %171 = vmatprep.subr.mxu0 0.0
  %172 = vmatpush1.msra.mxu0 0.0
  %173 = vmatprep.subr.mxu0 0.0
  %174 = vmatpush1.msra.mxu0 0.0
  %175 = vmatprep.subr.mxu0 0.0
  %176 = vmatpush1.msra.mxu0 0.0
  %177 = vmatprep.subr.mxu0 0.0
  %178 = vmatpush1.msra.mxu0 0.0
  %179 = vmatprep.subr.mxu0 0.0
  %180 = vmatpush1.msra.mxu0 0.0
  %181 = vmatprep.mubr.f32.mxu0 0.0
  %182 = vmatmul.mubr.f32.gmra.mrb[0].mxu0 %v79
  %v183 = vpop.f32.mrb[0].mxu0
  %v184 = vadd.f32 %v115, %v183
  %v185 = vpop.f32.mrb[0].mxu0
  %186 = vmatprep.mubr.f32.mxu0 0.0
  %187 = vmatmul.mubr.f32.gmra.mrb[0].mxu0 %v80
  %v188 = vpop.f32.mrb[0].mxu0
  %v189 = vadd.f32 %v115, %v188
  %v190 = vpop.f32.mrb[0].mxu0
  %191 = vmatprep.mubr.f32.mxu0 0.0
  %192 = vmatmul.mubr.f32.gmra.mrb[0].mxu0 %v81
  %v193 = vpop.f32.mrb[0].mxu0
  %v194 = vadd.f32 %v115, %v193
  %v195 = vpop.f32.mrb[0].mxu0
  %196 = vmatprep.mubr.f32.mxu0 0.0
  %197 = vmatmul.mubr.f32.gmra.mrb[0].mxu0 %v82
  %v198 = vpop.f32.mrb[0].mxu0
  %v199 = vadd.f32 %v115, %v198
  %v200 = vpop.f32.mrb[0].mxu0
  %201 = vmatprep.mubr.f32.mxu0 0.0
  %202 = vmatmul.mubr.f32.gmra.mrb[0].mxu0 %v83
  %v203 = vpop.f32.mrb[0].mxu0
  %v204 = vadd.f32 %v115, %v203
  %v205 = vpop.f32.mrb[0].mxu0
  %206 = vmatprep.mubr.f32.mxu0 0.0
  %207 = vmatmul.mubr.f32.gmra.mrb[0].mxu0 %v84
  %v208 = vpop.f32.mrb[0].mxu0
  %v209 = vadd.f32 %v115, %v208
  %v210 = vpop.f32.mrb[0].mxu0
  %211 = vmatprep.mubr.f32.mxu0 0.0
  %212 = vmatmul.mubr.f32.gmra.mrb[0].mxu0 %v85
  %v213 = vpop.f32.mrb[0].mxu0
  %v214 = vadd.f32 %v115, %v213
  %v215 = vpop.f32.mrb[0].mxu0
  %216 = vmatprep.mubr.f32.mxu0 0.0
  %217 = vmatmul.mubr.f32.gmra.mrb[0].mxu0 %v86
  %v218 = vpop.f32.mrb[0].mxu0
  %v219 = vadd.f32 %v115, %v218
  %v220 = vpop.f32.mrb[0].mxu0
  %221 = vmatprep.mubr.f32.mxu0 0.0
  %222 = vmatmul.mubr.f32.gmra.mrb[0].mxu0 %v87
  %v223 = vpop.f32.mrb[0].mxu0
  %v224 = vadd.f32 %v115, %v223
  %v225 = vpop.f32.mrb[0].mxu0
  %226 = vmatprep.mubr.f32.mxu0 0.0
  %227 = vmatmul.mubr.f32.gmra.mrb[0].mxu0 %v88
  %v228 = vpop.f32.mrb[0].mxu0
  %v229 = vadd.f32 %v115, %v228
  %v230 = vpop.f32.mrb[0].mxu0
  %231 = vmatprep.mubr.f32.mxu0 0.0
  %232 = vmatmul.mubr.f32.gmra.mrb[0].mxu0 %v89
  %v233 = vpop.f32.mrb[0].mxu0
  %v234 = vadd.f32 %v115, %v233
  %v235 = vpop.f32.mrb[0].mxu0
  %236 = vmatprep.mubr.f32.mxu0 0.0
  %237 = vmatmul.mubr.f32.gmra.mrb[0].mxu0 %v90
  %v238 = vpop.f32.mrb[0].mxu0
  %v239 = vadd.f32 %v115, %v238
  %v240 = vpop.f32.mrb[0].mxu0
  %241 = vmatprep.mubr.f32.mxu0 0.0
  %242 = vmatmul.mubr.f32.gmra.mrb[0].mxu0 %v91
  %v243 = vpop.f32.mrb[0].mxu0
  %v244 = vadd.f32 %v115, %v243
  %v245 = vpop.f32.mrb[0].mxu0
  %246 = vmatprep.mubr.f32.mxu0 0.0
  %247 = vmatmul.mubr.f32.gmra.mrb[0].mxu0 %v92
  %v248 = vpop.f32.mrb[0].mxu0
  %v249 = vadd.f32 %v115, %v248
  %v250 = vpop.f32.mrb[0].mxu0
  %251 = vmatprep.mubr.f32.mxu0 0.0
  %252 = vmatmul.mubr.f32.gmra.mrb[0].mxu0 %v93
  %v253 = vpop.f32.mrb[0].mxu0
  %v254 = vadd.f32 %v115, %v253
  %v255 = vpop.f32.mrb[0].mxu0
  %256 = vmatprep.mubr.f32.mxu0 0.0
  %257 = vmatmul.mubr.f32.gmra.mrb[0].mxu0 %v94
  %v258 = vpop.f32.mrb[0].mxu0
  %v259 = vadd.f32 %v115, %v258
  %v260 = vpop.f32.mrb[0].mxu0
  %261 = vmatprep.mubr.f32.mxu0 0.0
  %262 = vmatmul.mubr.f32.gmra.mrb[0].mxu0 %v95
  %v263 = vpop.f32.mrb[0].mxu0
  %v264 = vadd.f32 %v115, %v263
  %v265 = vpop.f32.mrb[0].mxu0
  %266 = vmatprep.mubr.f32.mxu0 0.0
  %267 = vmatmul.mubr.f32.gmra.mrb[0].mxu0 %v96
  %v268 = vpop.f32.mrb[0].mxu0
  %v269 = vadd.f32 %v115, %v268
  %v270 = vpop.f32.mrb[0].mxu0
  %271 = vmatprep.mubr.f32.mxu0 0.0
  %272 = vmatmul.mubr.f32.gmra.mrb[0].mxu0 %v97
  %v273 = vpop.f32.mrb[0].mxu0
  %v274 = vadd.f32 %v115, %v273
  %v275 = vpop.f32.mrb[0].mxu0
  %276 = vmatprep.mubr.f32.mxu0 0.0
  %277 = vmatmul.mubr.f32.gmra.mrb[0].mxu0 %v98
  %v278 = vpop.f32.mrb[0].mxu0
  %v279 = vadd.f32 %v115, %v278
  %v280 = vpop.f32.mrb[0].mxu0
  %281 = vmatprep.mubr.f32.mxu0 0.0
  %282 = vmatmul.mubr.f32.gmra.mrb[0].mxu0 %v99
  %v283 = vpop.f32.mrb[0].mxu0
  %v284 = vadd.f32 %v115, %v283
  %v285 = vpop.f32.mrb[0].mxu0
  %286 = vmatprep.mubr.f32.mxu0 0.0
  %287 = vmatmul.mubr.f32.gmra.mrb[0].mxu0 %v100
  %v288 = vpop.f32.mrb[0].mxu0
  %v289 = vadd.f32 %v115, %v288
  %v290 = vpop.f32.mrb[0].mxu0
  %291 = vmatprep.mubr.f32.mxu0 0.0
  %292 = vmatmul.mubr.f32.gmra.mrb[0].mxu0 %v101
  %v293 = vpop.f32.mrb[0].mxu0
  %v294 = vadd.f32 %v115, %v293
  %v295 = vpop.f32.mrb[0].mxu0
  %296 = vmatprep.mubr.f32.mxu0 0.0
  %297 = vmatmul.mubr.f32.gmra.mrb[0].mxu0 %v102
  %v298 = vpop.f32.mrb[0].mxu0
  %v299 = vadd.f32 %v115, %v298
  %v300 = vpop.f32.mrb[0].mxu0
  %301 = vmatprep.mubr.f32.mxu0 0.0
  %302 = vmatmul.mubr.f32.gmra.mrb[0].mxu0 %v103
  %v303 = vpop.f32.mrb[0].mxu0
  %v304 = vadd.f32 %v115, %v303
  %v305 = vpop.f32.mrb[0].mxu0
  %306 = vmatprep.mubr.f32.mxu0 0.0
  %307 = vmatmul.mubr.f32.gmra.mrb[0].mxu0 %v104
  %v308 = vpop.f32.mrb[0].mxu0
  %v309 = vadd.f32 %v115, %v308
  %v310 = vpop.f32.mrb[0].mxu0
  %311 = vmatprep.mubr.f32.mxu0 0.0
  %312 = vmatmul.mubr.f32.gmra.mrb[0].mxu0 %v105
  %v313 = vpop.f32.mrb[0].mxu0
  %v314 = vadd.f32 %v115, %v313
  %v315 = vpop.f32.mrb[0].mxu0
  %316 = vmatprep.mubr.f32.mxu0 0.0
  %317 = vmatmul.mubr.f32.gmra.mrb[0].mxu0 %v106
  %v318 = vpop.f32.mrb[0].mxu0
  %v319 = vadd.f32 %v115, %v318
  %v320 = vpop.f32.mrb[0].mxu0
  %321 = vmatprep.mubr.f32.mxu0 0.0
  %322 = vmatmul.mubr.f32.gmra.mrb[0].mxu0 %v107
  %v323 = vpop.f32.mrb[0].mxu0
  %v324 = vadd.f32 %v115, %v323
  %v325 = vpop.f32.mrb[0].mxu0
  %326 = vmatprep.mubr.f32.mxu0 0.0
  %327 = vmatmul.mubr.f32.gmra.mrb[0].mxu0 %v108
  %v328 = vpop.f32.mrb[0].mxu0
  %v329 = vadd.f32 %v115, %v328
  %v330 = vpop.f32.mrb[0].mxu0
  %331 = vmatprep.mubr.f32.mxu0 0.0
  %332 = vmatmul.mubr.f32.gmra.mrb[0].mxu0 %v109
  %v333 = vpop.f32.mrb[0].mxu0
  %v334 = vadd.f32 %v115, %v333
  %v335 = vpop.f32.mrb[0].mxu0
  %336 = vmatprep.mubr.f32.mxu0 0.0
  %337 = vmatmul.mubr.f32.gmra.mrb[0].mxu0 %v110
  %v338 = vpop.f32.mrb[0].mxu0
  %v339 = vadd.f32 %v115, %v338
  %v340 = vpop.f32.mrb[0].mxu0
  %341 = vdwg.mxu0
  %v342 = vtanh.pop %v184
  %v343 = vtanh.pop %v189
  %v344 = vtanh.pop %v194
  %v345 = vtanh.pop %v199
  %v346 = vtanh.pop %v204
  %v347 = vtanh.pop %v209
  %v348 = vtanh.pop %v214
  %v349 = vtanh.pop %v219
  %v350 = vtanh.pop %v224
  %v351 = vtanh.pop %v229
  %v352 = vtanh.pop %v234
  %v353 = vtanh.pop %v239
  %v354 = vtanh.pop %v244
  %v355 = vtanh.pop %v249
  %v356 = vtanh.pop %v254
  %v357 = vtanh.pop %v259
  %v358 = vtanh.pop %v264
  %v359 = vtanh.pop %v269
  %v360 = vtanh.pop %v274
  %v361 = vtanh.pop %v279
  %v362 = vtanh.pop %v284
  %v363 = vtanh.pop %v289
  %v364 = vtanh.pop %v294
  %v365 = vtanh.pop %v299
  %v366 = vtanh.pop %v304
  %v367 = vtanh.pop %v309
  %v368 = vtanh.pop %v314
  %v369 = vtanh.pop %v319
  %v370 = vtanh.pop %v324
  %v371 = vtanh.pop %v329
  %v372 = vtanh.pop %v334
  %v373 = vtanh.pop %v339
  %374 = vmatprep.subr.mxu0 0.0
  %375 = vmatpush1.msra.mxu0 %v342
  %376 = vmatprep.subr.mxu0 0.0
  %377 = vmatpush1.msra.mxu0 %v343
  %378 = vmatprep.subr.mxu0 0.0
  %379 = vmatpush1.msra.mxu0 %v344
  %380 = vmatprep.subr.mxu0 0.0
  %381 = vmatpush1.msra.mxu0 %v345
  %382 = vmatprep.subr.mxu0 0.0
  %383 = vmatpush1.msra.mxu0 %v346
  %384 = vmatprep.subr.mxu0 0.0
  %385 = vmatpush1.msra.mxu0 %v347
  %386 = vmatprep.subr.mxu0 0.0
  %387 = vmatpush1.msra.mxu0 %v348
  %388 = vmatprep.subr.mxu0 0.0
  %389 = vmatpush1.msra.mxu0 %v349
  %390 = vmatprep.subr.mxu0 0.0
  %391 = vmatpush1.msra.mxu0 %v350
  %392 = vmatprep.subr.mxu0 0.0
  %393 = vmatpush1.msra.mxu0 %v351
  %394 = vmatprep.subr.mxu0 0.0
  %395 = vmatpush1.msra.mxu0 %v352
  %396 = vmatprep.subr.mxu0 0.0
  %397 = vmatpush1.msra.mxu0 %v353
  %398 = vmatprep.subr.mxu0 0.0
  %399 = vmatpush1.msra.mxu0 %v354
  %400 = vmatprep.subr.mxu0 0.0
  %401 = vmatpush1.msra.mxu0 %v355
  %402 = vmatprep.subr.mxu0 0.0
  %403 = vmatpush1.msra.mxu0 %v356
  %404 = vmatprep.subr.mxu0 0.0
  %405 = vmatpush1.msra.mxu0 %v357
  %406 = vmatprep.subr.mxu0 0.0
  %407 = vmatpush1.msra.mxu0 %v358
  %408 = vmatprep.subr.mxu0 0.0
  %409 = vmatpush1.msra.mxu0 %v359
  %410 = vmatprep.subr.mxu0 0.0
  %411 = vmatpush1.msra.mxu0 %v360
  %412 = vmatprep.subr.mxu0 0.0
  %413 = vmatpush1.msra.mxu0 %v361
  %414 = vmatprep.subr.mxu0 0.0
  %415 = vmatpush1.msra.mxu0 %v362
  %416 = vmatprep.subr.mxu0 0.0
  %417 = vmatpush1.msra.mxu0 %v363
  %418 = vmatprep.subr.mxu0 0.0
  %419 = vmatpush1.msra.mxu0 %v364
  %420 = vmatprep.subr.mxu0 0.0
  %421 = vmatpush1.msra.mxu0 %v365
  %422 = vmatprep.subr.mxu0 0.0
  %423 = vmatpush1.msra.mxu0 %v366
  %424 = vmatprep.subr.mxu0 0.0
  %425 = vmatpush1.msra.mxu0 %v367
  %426 = vmatprep.subr.mxu0 0.0
  %427 = vmatpush1.msra.mxu0 %v368
  %428 = vmatprep.subr.mxu0 0.0
  %429 = vmatpush1.msra.mxu0 %v369
  %430 = vmatprep.subr.mxu0 0.0
  %431 = vmatpush1.msra.mxu0 %v370
  %432 = vmatprep.subr.mxu0 0.0
  %433 = vmatpush1.msra.mxu0 %v371
  %434 = vmatprep.subr.mxu0 0.0
  %435 = vmatpush1.msra.mxu0 %v372
  %436 = vmatprep.subr.mxu0 0.0
  %437 = vmatpush1.msra.mxu0 %v373
  %438 = vmatprep.mubr.f32.mxu0 %v60
  %439 = vmatmul.mubr.f32.gmra.mrb[0].mxu0 %v59
  %v440 = vpop.f32.mrb[0].mxu0
  %v441 = vadd.f32 0.0, %v440
  %v442 = vpop.f32.mrb[0].mxu0
  %443 = vdwg.mxu0
  %v444 = vmul.f32 %v441, %v78
  %vm445 = vcmask 1040384
  %v446 = vsel %vm445, %v444, 0.0
  %447 = vadd.xlane.f32.xlu0 %v446
  %v448 = vpop.xlane.xlu0 %447
  %v449 = vrot.slane %v448, 4
  %v450 = vadd.f32 %v448, %v449
  %v451 = vrot.slane %v450, 2
  %v452 = vadd.f32 %v450, %v451
  %v453 = vrot.slane %v452, 1
  %v454 = vadd.f32 %v452, %v453
  %s455 = vtos %v454
  %vm456 = vcmp.eq.s32.totalorder %v50, 0
  %v457 = vstv %s455
  %v458 = vsel %vm456, %v457, 0.0
  %v459 = vadd.f32 %v458, 0.0
  %v460 = vld [vmem:[%s39 + $0x8] sm:$0xff]
  %v461 = vld [vmem:[%s39 + $0x28] sm:$0xff]
  %v462 = vld [vmem:[%s39 + $0x48] sm:$0xff]
  %v463 = vld [vmem:[%s39 + $0x68] sm:$0xff]
  %v464 = vld [vmem:[%s39 + $0x88] sm:$0xff]
  %v465 = vld [vmem:[%s39 + $0xa8] sm:$0xff]
  %v466 = vld [vmem:[%s39 + $0xc8] sm:$0xff]
  %v467 = vld [vmem:[%s39 + $0xe8] sm:$0xff]
  %v468 = vld [vmem:[%s39 + $0x108] sm:$0xff]
  %v469 = vld [vmem:[%s39 + $0x128] sm:$0xff]
  %v470 = vld [vmem:[%s39 + $0x148] sm:$0xff]
  %v471 = vld [vmem:[%s39 + $0x168] sm:$0xff]
  %v472 = vld [vmem:[%s39 + $0x188] sm:$0xff]
  %v473 = vld [vmem:[%s39 + $0x1a8] sm:$0xff]
  %v474 = vld [vmem:[%s39 + $0x1c8] sm:$0xff]
  %v475 = vld [vmem:[%s39 + $0x1e8] sm:$0xff]
  %v476 = vld [vmem:[%s39 + $0x208] sm:$0xff]
  %v477 = vld [vmem:[%s39 + $0x228] sm:$0xff]
  %v478 = vld [vmem:[%s39 + $0x248] sm:$0xff]
  %v479 = vld [vmem:[%s39 + $0x268] sm:$0xff]
  %v480 = vld [vmem:[%s39 + $0x288] sm:$0xff]
  %v481 = vld [vmem:[%s39 + $0x2a8] sm:$0xff]
  %v482 = vld [vmem:[%s39 + $0x2c8] sm:$0xff]
  %v483 = vld [vmem:[%s39 + $0x2e8] sm:$0xff]
  %v484 = vld [vmem:[%s39 + $0x308] sm:$0xff]
  %v485 = vld [vmem:[%s39 + $0x328] sm:$0xff]
  %v486 = vld [vmem:[%s39 + $0x348] sm:$0xff]
  %v487 = vld [vmem:[%s39 + $0x368] sm:$0xff]
  %v488 = vld [vmem:[%s39 + $0x388] sm:$0xff]
  %v489 = vld [vmem:[%s39 + $0x3a8] sm:$0xff]
  %v490 = vld [vmem:[%s39 + $0x3c8] sm:$0xff]
  %v491 = vld [vmem:[%s39 + $0x3e8] sm:$0xff]
  %492 = vmatprep.subr.mxu0 0.0
  %493 = vmatpush1.msra.mxu0 %v61
  %494 = vmatprep.subr.mxu0 0.0
  %495 = vmatpush1.msra.mxu0 %v62
  %496 = vmatprep.subr.mxu0 0.0
  %497 = vmatpush1.msra.mxu0 %v63
  %498 = vmatprep.subr.mxu0 0.0
  %499 = vmatpush1.msra.mxu0 %v64
  %500 = vmatprep.subr.mxu0 0.0
  %501 = vmatpush1.msra.mxu0 %v65
  %502 = vmatprep.subr.mxu0 0.0
  %503 = vmatpush1.msra.mxu0 %v66
  %504 = vmatprep.subr.mxu0 0.0
  %505 = vmatpush1.msra.mxu0 %v67
  %506 = vmatprep.subr.mxu0 0.0
  %507 = vmatpush1.msra.mxu0 %v68
  %508 = vmatprep.subr.mxu0 0.0
  %509 = vmatpush1.msra.mxu0 %v69
  %510 = vmatprep.subr.mxu0 0.0
  %511 = vmatpush1.msra.mxu0 %v70
  %512 = vmatprep.subr.mxu0 0.0
  %513 = vmatpush1.msra.mxu0 %v71
  %514 = vmatprep.subr.mxu0 0.0
  %515 = vmatpush1.msra.mxu0 %v72
  %516 = vmatprep.subr.mxu0 0.0
  %517 = vmatpush1.msra.mxu0 %v73
  %518 = vmatprep.subr.mxu0 0.0
  %519 = vmatpush1.msra.mxu0 %v74
  %520 = vmatprep.subr.mxu0 0.0
  %521 = vmatpush1.msra.mxu0 %v75
  %522 = vmatprep.subr.mxu0 0.0
  %523 = vmatpush1.msra.mxu0 %v76
  %524 = vmatprep.subr.mxu0 0.0
  %525 = vmatpush1.msra.mxu0 0.0
  %526 = vmatprep.subr.mxu0 0.0
  %527 = vmatpush1.msra.mxu0 0.0
  %528 = vmatprep.subr.mxu0 0.0
  %529 = vmatpush1.msra.mxu0 0.0
  %530 = vmatprep.subr.mxu0 0.0
  %531 = vmatpush1.msra.mxu0 0.0
  %532 = vmatprep.subr.mxu0 0.0
  %533 = vmatpush1.msra.mxu0 0.0
  %534 = vmatprep.subr.mxu0 0.0
  %535 = vmatpush1.msra.mxu0 0.0
  %536 = vmatprep.subr.mxu0 0.0
  %537 = vmatpush1.msra.mxu0 0.0
  %538 = vmatprep.subr.mxu0 0.0
  %539 = vmatpush1.msra.mxu0 0.0
  %540 = vmatprep.subr.mxu0 0.0
  %541 = vmatpush1.msra.mxu0 0.0
  %542 = vmatprep.subr.mxu0 0.0
  %543 = vmatpush1.msra.mxu0 0.0
  %544 = vmatprep.subr.mxu0 0.0
  %545 = vmatpush1.msra.mxu0 0.0
  %546 = vmatprep.subr.mxu0 0.0
  %547 = vmatpush1.msra.mxu0 0.0
  %548 = vmatprep.subr.mxu0 0.0
  %549 = vmatpush1.msra.mxu0 0.0
  %550 = vmatprep.subr.mxu0 0.0
  %551 = vmatpush1.msra.mxu0 0.0
  %552 = vmatprep.subr.mxu0 0.0
  %553 = vmatpush1.msra.mxu0 0.0
  %554 = vmatprep.subr.mxu0 0.0
  %555 = vmatpush1.msra.mxu0 0.0
  %556 = vmatprep.mubr.f32.mxu0 0.0
  %557 = vmatmul.mubr.f32.gmra.mrb[0].mxu0 %v460
  %v558 = vpop.f32.mrb[0].mxu0
  %v559 = vadd.f32 %v115, %v558
  %v560 = vpop.f32.mrb[0].mxu0
  %561 = vmatprep.mubr.f32.mxu0 0.0
  %562 = vmatmul.mubr.f32.gmra.mrb[0].mxu0 %v461
  %v563 = vpop.f32.mrb[0].mxu0
  %v564 = vadd.f32 %v115, %v563
  %v565 = vpop.f32.mrb[0].mxu0
  %566 = vmatprep.mubr.f32.mxu0 0.0
  %567 = vmatmul.mubr.f32.gmra.mrb[0].mxu0 %v462
  %v568 = vpop.f32.mrb[0].mxu0
  %v569 = vadd.f32 %v115, %v568
  %v570 = vpop.f32.mrb[0].mxu0
  %571 = vmatprep.mubr.f32.mxu0 0.0
  %572 = vmatmul.mubr.f32.gmra.mrb[0].mxu0 %v463
  %v573 = vpop.f32.mrb[0].mxu0
  %v574 = vadd.f32 %v115, %v573
  %v575 = vpop.f32.mrb[0].mxu0
  %576 = vmatprep.mubr.f32.mxu0 0.0
  %577 = vmatmul.mubr.f32.gmra.mrb[0].mxu0 %v464
  %v578 = vpop.f32.mrb[0].mxu0
  %v579 = vadd.f32 %v115, %v578
  %v580 = vpop.f32.mrb[0].mxu0
  %581 = vmatprep.mubr.f32.mxu0 0.0
  %582 = vmatmul.mubr.f32.gmra.mrb[0].mxu0 %v465
  %v583 = vpop.f32.mrb[0].mxu0
  %v584 = vadd.f32 %v115, %v583
  %v585 = vpop.f32.mrb[0].mxu0
  %586 = vmatprep.mubr.f32.mxu0 0.0
  %587 = vmatmul.mubr.f32.gmra.mrb[0].mxu0 %v466
  %v588 = vpop.f32.mrb[0].mxu0
  %v589 = vadd.f32 %v115, %v588
  %v590 = vpop.f32.mrb[0].mxu0
  %591 = vmatprep.mubr.f32.mxu0 0.0
  %592 = vmatmul.mubr.f32.gmra.mrb[0].mxu0 %v467
  %v593 = vpop.f32.mrb[0].mxu0
  %v594 = vadd.f32 %v115, %v593
  %v595 = vpop.f32.mrb[0].mxu0
  %596 = vmatprep.mubr.f32.mxu0 0.0
  %597 = vmatmul.mubr.f32.gmra.mrb[0].mxu0 %v468
  %v598 = vpop.f32.mrb[0].mxu0
  %v599 = vadd.f32 %v115, %v598
  %v600 = vpop.f32.mrb[0].mxu0
  %601 = vmatprep.mubr.f32.mxu0 0.0
  %602 = vmatmul.mubr.f32.gmra.mrb[0].mxu0 %v469
  %v603 = vpop.f32.mrb[0].mxu0
  %v604 = vadd.f32 %v115, %v603
  %v605 = vpop.f32.mrb[0].mxu0
  %606 = vmatprep.mubr.f32.mxu0 0.0
  %607 = vmatmul.mubr.f32.gmra.mrb[0].mxu0 %v470
  %v608 = vpop.f32.mrb[0].mxu0
  %v609 = vadd.f32 %v115, %v608
  %v610 = vpop.f32.mrb[0].mxu0
  %611 = vmatprep.mubr.f32.mxu0 0.0
  %612 = vmatmul.mubr.f32.gmra.mrb[0].mxu0 %v471
  %v613 = vpop.f32.mrb[0].mxu0
  %v614 = vadd.f32 %v115, %v613
  %v615 = vpop.f32.mrb[0].mxu0
  %616 = vmatprep.mubr.f32.mxu0 0.0
  %617 = vmatmul.mubr.f32.gmra.mrb[0].mxu0 %v472
  %v618 = vpop.f32.mrb[0].mxu0
  %v619 = vadd.f32 %v115, %v618
  %v620 = vpop.f32.mrb[0].mxu0
  %621 = vmatprep.mubr.f32.mxu0 0.0
  %622 = vmatmul.mubr.f32.gmra.mrb[0].mxu0 %v473
  %v623 = vpop.f32.mrb[0].mxu0
  %v624 = vadd.f32 %v115, %v623
  %v625 = vpop.f32.mrb[0].mxu0
  %626 = vmatprep.mubr.f32.mxu0 0.0
  %627 = vmatmul.mubr.f32.gmra.mrb[0].mxu0 %v474
  %v628 = vpop.f32.mrb[0].mxu0
  %v629 = vadd.f32 %v115, %v628
  %v630 = vpop.f32.mrb[0].mxu0
  %631 = vmatprep.mubr.f32.mxu0 0.0
  %632 = vmatmul.mubr.f32.gmra.mrb[0].mxu0 %v475
  %v633 = vpop.f32.mrb[0].mxu0
  %v634 = vadd.f32 %v115, %v633
  %v635 = vpop.f32.mrb[0].mxu0
  %636 = vmatprep.mubr.f32.mxu0 0.0
  %637 = vmatmul.mubr.f32.gmra.mrb[0].mxu0 %v476
  %v638 = vpop.f32.mrb[0].mxu0
  %v639 = vadd.f32 %v115, %v638
  %v640 = vpop.f32.mrb[0].mxu0
  %641 = vmatprep.mubr.f32.mxu0 0.0
  %642 = vmatmul.mubr.f32.gmra.mrb[0].mxu0 %v477
  %v643 = vpop.f32.mrb[0].mxu0
  %v644 = vadd.f32 %v115, %v643
  %v645 = vpop.f32.mrb[0].mxu0
  %646 = vmatprep.mubr.f32.mxu0 0.0
  %647 = vmatmul.mubr.f32.gmra.mrb[0].mxu0 %v478
  %v648 = vpop.f32.mrb[0].mxu0
  %v649 = vadd.f32 %v115, %v648
  %v650 = vpop.f32.mrb[0].mxu0
  %651 = vmatprep.mubr.f32.mxu0 0.0
  %652 = vmatmul.mubr.f32.gmra.mrb[0].mxu0 %v479
  %v653 = vpop.f32.mrb[0].mxu0
  %v654 = vadd.f32 %v115, %v653
  %v655 = vpop.f32.mrb[0].mxu0
  %656 = vmatprep.mubr.f32.mxu0 0.0
  %657 = vmatmul.mubr.f32.gmra.mrb[0].mxu0 %v480
  %v658 = vpop.f32.mrb[0].mxu0
  %v659 = vadd.f32 %v115, %v658
  %v660 = vpop.f32.mrb[0].mxu0
  %661 = vmatprep.mubr.f32.mxu0 0.0
  %662 = vmatmul.mubr.f32.gmra.mrb[0].mxu0 %v481
  %v663 = vpop.f32.mrb[0].mxu0
  %v664 = vadd.f32 %v115, %v663
  %v665 = vpop.f32.mrb[0].mxu0
  %666 = vmatprep.mubr.f32.mxu0 0.0
  %667 = vmatmul.mubr.f32.gmra.mrb[0].mxu0 %v482
  %v668 = vpop.f32.mrb[0].mxu0
  %v669 = vadd.f32 %v115, %v668
  %v670 = vpop.f32.mrb[0].mxu0
  %671 = vmatprep.mubr.f32.mxu0 0.0
  %672 = vmatmul.mubr.f32.gmra.mrb[0].mxu0 %v483
  %v673 = vpop.f32.mrb[0].mxu0
  %v674 = vadd.f32 %v115, %v673
  %v675 = vpop.f32.mrb[0].mxu0
  %676 = vmatprep.mubr.f32.mxu0 0.0
  %677 = vmatmul.mubr.f32.gmra.mrb[0].mxu0 %v484
  %v678 = vpop.f32.mrb[0].mxu0
  %v679 = vadd.f32 %v115, %v678
  %v680 = vpop.f32.mrb[0].mxu0
  %681 = vmatprep.mubr.f32.mxu0 0.0
  %682 = vmatmul.mubr.f32.gmra.mrb[0].mxu0 %v485
  %v683 = vpop.f32.mrb[0].mxu0
  %v684 = vadd.f32 %v115, %v683
  %v685 = vpop.f32.mrb[0].mxu0
  %686 = vmatprep.mubr.f32.mxu0 0.0
  %687 = vmatmul.mubr.f32.gmra.mrb[0].mxu0 %v486
  %v688 = vpop.f32.mrb[0].mxu0
  %v689 = vadd.f32 %v115, %v688
  %v690 = vpop.f32.mrb[0].mxu0
  %691 = vmatprep.mubr.f32.mxu0 0.0
  %692 = vmatmul.mubr.f32.gmra.mrb[0].mxu0 %v487
  %v693 = vpop.f32.mrb[0].mxu0
  %v694 = vadd.f32 %v115, %v693
  %v695 = vpop.f32.mrb[0].mxu0
  %696 = vmatprep.mubr.f32.mxu0 0.0
  %697 = vmatmul.mubr.f32.gmra.mrb[0].mxu0 %v488
  %v698 = vpop.f32.mrb[0].mxu0
  %v699 = vadd.f32 %v115, %v698
  %v700 = vpop.f32.mrb[0].mxu0
  %701 = vmatprep.mubr.f32.mxu0 0.0
  %702 = vmatmul.mubr.f32.gmra.mrb[0].mxu0 %v489
  %v703 = vpop.f32.mrb[0].mxu0
  %v704 = vadd.f32 %v115, %v703
  %v705 = vpop.f32.mrb[0].mxu0
  %706 = vmatprep.mubr.f32.mxu0 0.0
  %707 = vmatmul.mubr.f32.gmra.mrb[0].mxu0 %v490
  %v708 = vpop.f32.mrb[0].mxu0
  %v709 = vadd.f32 %v115, %v708
  %v710 = vpop.f32.mrb[0].mxu0
  %711 = vmatprep.mubr.f32.mxu0 0.0
  %712 = vmatmul.mubr.f32.gmra.mrb[0].mxu0 %v491
  %v713 = vpop.f32.mrb[0].mxu0
  %v714 = vadd.f32 %v115, %v713
  %v715 = vpop.f32.mrb[0].mxu0
  %716 = vdwg.mxu0
  %v717 = vtanh.pop %v559
  %v718 = vtanh.pop %v564
  %v719 = vtanh.pop %v569
  %v720 = vtanh.pop %v574
  %v721 = vtanh.pop %v579
  %v722 = vtanh.pop %v584
  %v723 = vtanh.pop %v589
  %v724 = vtanh.pop %v594
  %v725 = vtanh.pop %v599
  %v726 = vtanh.pop %v604
  %v727 = vtanh.pop %v609
  %v728 = vtanh.pop %v614
  %v729 = vtanh.pop %v619
  %v730 = vtanh.pop %v624
  %v731 = vtanh.pop %v629
  %v732 = vtanh.pop %v634
  %v733 = vtanh.pop %v639
  %v734 = vtanh.pop %v644
  %v735 = vtanh.pop %v649
  %v736 = vtanh.pop %v654
  %v737 = vtanh.pop %v659
  %v738 = vtanh.pop %v664
  %v739 = vtanh.pop %v669
  %v740 = vtanh.pop %v674
  %v741 = vtanh.pop %v679
  %v742 = vtanh.pop %v684
  %v743 = vtanh.pop %v689
  %v744 = vtanh.pop %v694
  %v745 = vtanh.pop %v699
  %v746 = vtanh.pop %v704
  %v747 = vtanh.pop %v709
  %v748 = vtanh.pop %v714
  %749 = vmatprep.subr.mxu0 0.0
  %750 = vmatpush1.msra.mxu0 %v717
  %751 = vmatprep.subr.mxu0 0.0
  %752 = vmatpush1.msra.mxu0 %v718
  %753 = vmatprep.subr.mxu0 0.0
  %754 = vmatpush1.msra.mxu0 %v719
  %755 = vmatprep.subr.mxu0 0.0
  %756 = vmatpush1.msra.mxu0 %v720
  %757 = vmatprep.subr.mxu0 0.0
  %758 = vmatpush1.msra.mxu0 %v721
  %759 = vmatprep.subr.mxu0 0.0
  %760 = vmatpush1.msra.mxu0 %v722
  %761 = vmatprep.subr.mxu0 0.0
  %762 = vmatpush1.msra.mxu0 %v723
  %763 = vmatprep.subr.mxu0 0.0
  %764 = vmatpush1.msra.mxu0 %v724
  %765 = vmatprep.subr.mxu0 0.0
  %766 = vmatpush1.msra.mxu0 %v725
  %767 = vmatprep.subr.mxu0 0.0
  %768 = vmatpush1.msra.mxu0 %v726
  %769 = vmatprep.subr.mxu0 0.0
  %770 = vmatpush1.msra.mxu0 %v727
  %771 = vmatprep.subr.mxu0 0.0
  %772 = vmatpush1.msra.mxu0 %v728
  %773 = vmatprep.subr.mxu0 0.0
  %774 = vmatpush1.msra.mxu0 %v729
  %775 = vmatprep.subr.mxu0 0.0
  %776 = vmatpush1.msra.mxu0 %v730
  %777 = vmatprep.subr.mxu0 0.0
  %778 = vmatpush1.msra.mxu0 %v731
  %779 = vmatprep.subr.mxu0 0.0
  %780 = vmatpush1.msra.mxu0 %v732
  %781 = vmatprep.subr.mxu0 0.0
  %782 = vmatpush1.msra.mxu0 %v733
  %783 = vmatprep.subr.mxu0 0.0
  %784 = vmatpush1.msra.mxu0 %v734
  %785 = vmatprep.subr.mxu0 0.0
  %786 = vmatpush1.msra.mxu0 %v735
  %787 = vmatprep.subr.mxu0 0.0
  %788 = vmatpush1.msra.mxu0 %v736
  %789 = vmatprep.subr.mxu0 0.0
  %790 = vmatpush1.msra.mxu0 %v737
  %791 = vmatprep.subr.mxu0 0.0
  %792 = vmatpush1.msra.mxu0 %v738
  %793 = vmatprep.subr.mxu0 0.0
  %794 = vmatpush1.msra.mxu0 %v739
  %795 = vmatprep.subr.mxu0 0.0
  %796 = vmatpush1.msra.mxu0 %v740
  %797 = vmatprep.subr.mxu0 0.0
  %798 = vmatpush1.msra.mxu0 %v741
  %799 = vmatprep.subr.mxu0 0.0
  %800 = vmatpush1.msra.mxu0 %v742
  %801 = vmatprep.subr.mxu0 0.0
  %802 = vmatpush1.msra.mxu0 %v743
  %803 = vmatprep.subr.mxu0 0.0
  %804 = vmatpush1.msra.mxu0 %v744
  %805 = vmatprep.subr.mxu0 0.0
  %806 = vmatpush1.msra.mxu0 %v745
  %807 = vmatprep.subr.mxu0 0.0
  %808 = vmatpush1.msra.mxu0 %v746
  %809 = vmatprep.subr.mxu0 0.0
  %810 = vmatpush1.msra.mxu0 %v747
  %811 = vmatprep.subr.mxu0 0.0
  %812 = vmatpush1.msra.mxu0 %v748
  %813 = vmatprep.mubr.f32.mxu0 %v60
  %814 = vmatmul.mubr.f32.gmra.mrb[0].mxu0 %v59
  %v815 = vpop.f32.mrb[0].mxu0
  %v816 = vadd.f32 0.0, %v815
  %v817 = vpop.f32.mrb[0].mxu0
  %818 = vdwg.mxu0
  %v819 = vmul.f32 %v816, %v78
  %v820 = vsel %vm445, %v819, 0.0
  %821 = vadd.xlane.f32.xlu0 %v820
  %v822 = vpop.xlane.xlu0 %821
  %v823 = vrot.slane %v822, 4
  %v824 = vadd.f32 %v822, %v823
  %v825 = vrot.slane %v824, 2
  %v826 = vadd.f32 %v824, %v825
  %v827 = vrot.slane %v826, 1
  %v828 = vadd.f32 %v826, %v827
  %s829 = vtos %v828
  %vm830 = vcmp.eq.s32.totalorder %v50, 1
  %v831 = vstv %s829
  %v832 = vsel %vm830, %v831, 0.0
  %v833 = vadd.f32 %v459, %v832
  %v834 = vld [vmem:[%s39 + $0x10] sm:$0xff]
  %v835 = vld [vmem:[%s39 + $0x30] sm:$0xff]
  %v836 = vld [vmem:[%s39 + $0x50] sm:$0xff]
  %v837 = vld [vmem:[%s39 + $0x70] sm:$0xff]
  %v838 = vld [vmem:[%s39 + $0x90] sm:$0xff]
  %v839 = vld [vmem:[%s39 + $0xb0] sm:$0xff]
  %v840 = vld [vmem:[%s39 + $0xd0] sm:$0xff]
  %v841 = vld [vmem:[%s39 + $0xf0] sm:$0xff]
  %v842 = vld [vmem:[%s39 + $0x110] sm:$0xff]
  %v843 = vld [vmem:[%s39 + $0x130] sm:$0xff]
  %v844 = vld [vmem:[%s39 + $0x150] sm:$0xff]
  %v845 = vld [vmem:[%s39 + $0x170] sm:$0xff]
  %v846 = vld [vmem:[%s39 + $0x190] sm:$0xff]
  %v847 = vld [vmem:[%s39 + $0x1b0] sm:$0xff]
  %v848 = vld [vmem:[%s39 + $0x1d0] sm:$0xff]
  %v849 = vld [vmem:[%s39 + $0x1f0] sm:$0xff]
  %v850 = vld [vmem:[%s39 + $0x210] sm:$0xff]
  %v851 = vld [vmem:[%s39 + $0x230] sm:$0xff]
  %v852 = vld [vmem:[%s39 + $0x250] sm:$0xff]
  %v853 = vld [vmem:[%s39 + $0x270] sm:$0xff]
  %v854 = vld [vmem:[%s39 + $0x290] sm:$0xff]
  %v855 = vld [vmem:[%s39 + $0x2b0] sm:$0xff]
  %v856 = vld [vmem:[%s39 + $0x2d0] sm:$0xff]
  %v857 = vld [vmem:[%s39 + $0x2f0] sm:$0xff]
  %v858 = vld [vmem:[%s39 + $0x310] sm:$0xff]
  %v859 = vld [vmem:[%s39 + $0x330] sm:$0xff]
  %v860 = vld [vmem:[%s39 + $0x350] sm:$0xff]
  %v861 = vld [vmem:[%s39 + $0x370] sm:$0xff]
  %v862 = vld [vmem:[%s39 + $0x390] sm:$0xff]
  %v863 = vld [vmem:[%s39 + $0x3b0] sm:$0xff]
  %v864 = vld [vmem:[%s39 + $0x3d0] sm:$0xff]
  %v865 = vld [vmem:[%s39 + $0x3f0] sm:$0xff]
  %866 = vmatprep.subr.mxu0 0.0
  %867 = vmatpush1.msra.mxu0 %v61
  %868 = vmatprep.subr.mxu0 0.0
  %869 = vmatpush1.msra.mxu0 %v62
  %870 = vmatprep.subr.mxu0 0.0
  %871 = vmatpush1.msra.mxu0 %v63
  %872 = vmatprep.subr.mxu0 0.0
  %873 = vmatpush1.msra.mxu0 %v64
  %874 = vmatprep.subr.mxu0 0.0
  %875 = vmatpush1.msra.mxu0 %v65
  %876 = vmatprep.subr.mxu0 0.0
  %877 = vmatpush1.msra.mxu0 %v66
  %878 = vmatprep.subr.mxu0 0.0
  %879 = vmatpush1.msra.mxu0 %v67
  %880 = vmatprep.subr.mxu0 0.0
  %881 = vmatpush1.msra.mxu0 %v68
  %882 = vmatprep.subr.mxu0 0.0
  %883 = vmatpush1.msra.mxu0 %v69
  %884 = vmatprep.subr.mxu0 0.0
  %885 = vmatpush1.msra.mxu0 %v70
  %886 = vmatprep.subr.mxu0 0.0
  %887 = vmatpush1.msra.mxu0 %v71
  %888 = vmatprep.subr.mxu0 0.0
  %889 = vmatpush1.msra.mxu0 %v72
  %890 = vmatprep.subr.mxu0 0.0
  %891 = vmatpush1.msra.mxu0 %v73
  %892 = vmatprep.subr.mxu0 0.0
  %893 = vmatpush1.msra.mxu0 %v74
  %894 = vmatprep.subr.mxu0 0.0
  %895 = vmatpush1.msra.mxu0 %v75
  %896 = vmatprep.subr.mxu0 0.0
  %897 = vmatpush1.msra.mxu0 %v76
  %898 = vmatprep.subr.mxu0 0.0
  %899 = vmatpush1.msra.mxu0 0.0
  %900 = vmatprep.subr.mxu0 0.0
  %901 = vmatpush1.msra.mxu0 0.0
  %902 = vmatprep.subr.mxu0 0.0
  %903 = vmatpush1.msra.mxu0 0.0
  %904 = vmatprep.subr.mxu0 0.0
  %905 = vmatpush1.msra.mxu0 0.0
  %906 = vmatprep.subr.mxu0 0.0
  %907 = vmatpush1.msra.mxu0 0.0
  %908 = vmatprep.subr.mxu0 0.0
  %909 = vmatpush1.msra.mxu0 0.0
  %910 = vmatprep.subr.mxu0 0.0
  %911 = vmatpush1.msra.mxu0 0.0
  %912 = vmatprep.subr.mxu0 0.0
  %913 = vmatpush1.msra.mxu0 0.0
  %914 = vmatprep.subr.mxu0 0.0
  %915 = vmatpush1.msra.mxu0 0.0
  %916 = vmatprep.subr.mxu0 0.0
  %917 = vmatpush1.msra.mxu0 0.0
  %918 = vmatprep.subr.mxu0 0.0
  %919 = vmatpush1.msra.mxu0 0.0
  %920 = vmatprep.subr.mxu0 0.0
  %921 = vmatpush1.msra.mxu0 0.0
  %922 = vmatprep.subr.mxu0 0.0
  %923 = vmatpush1.msra.mxu0 0.0
  %924 = vmatprep.subr.mxu0 0.0
  %925 = vmatpush1.msra.mxu0 0.0
  %926 = vmatprep.subr.mxu0 0.0
  %927 = vmatpush1.msra.mxu0 0.0
  %928 = vmatprep.subr.mxu0 0.0
  %929 = vmatpush1.msra.mxu0 0.0
  %930 = vmatprep.mubr.f32.mxu0 0.0
  %931 = vmatmul.mubr.f32.gmra.mrb[0].mxu0 %v834
  %v932 = vpop.f32.mrb[0].mxu0
  %v933 = vadd.f32 %v115, %v932
  %v934 = vpop.f32.mrb[0].mxu0
  %935 = vmatprep.mubr.f32.mxu0 0.0
  %936 = vmatmul.mubr.f32.gmra.mrb[0].mxu0 %v835
  %v937 = vpop.f32.mrb[0].mxu0
  %v938 = vadd.f32 %v115, %v937
  %v939 = vpop.f32.mrb[0].mxu0
  %940 = vmatprep.mubr.f32.mxu0 0.0
  %941 = vmatmul.mubr.f32.gmra.mrb[0].mxu0 %v836
  %v942 = vpop.f32.mrb[0].mxu0
  %v943 = vadd.f32 %v115, %v942
  %v944 = vpop.f32.mrb[0].mxu0
  %945 = vmatprep.mubr.f32.mxu0 0.0
  %946 = vmatmul.mubr.f32.gmra.mrb[0].mxu0 %v837
  %v947 = vpop.f32.mrb[0].mxu0
  %v948 = vadd.f32 %v115, %v947
  %v949 = vpop.f32.mrb[0].mxu0
  %950 = vmatprep.mubr.f32.mxu0 0.0
  %951 = vmatmul.mubr.f32.gmra.mrb[0].mxu0 %v838
  %v952 = vpop.f32.mrb[0].mxu0
  %v953 = vadd.f32 %v115, %v952
  %v954 = vpop.f32.mrb[0].mxu0
  %955 = vmatprep.mubr.f32.mxu0 0.0
  %956 = vmatmul.mubr.f32.gmra.mrb[0].mxu0 %v839
  %v957 = vpop.f32.mrb[0].mxu0
  %v958 = vadd.f32 %v115, %v957
  %v959 = vpop.f32.mrb[0].mxu0
  %960 = vmatprep.mubr.f32.mxu0 0.0
  %961 = vmatmul.mubr.f32.gmra.mrb[0].mxu0 %v840
  %v962 = vpop.f32.mrb[0].mxu0
  %v963 = vadd.f32 %v115, %v962
  %v964 = vpop.f32.mrb[0].mxu0
  %965 = vmatprep.mubr.f32.mxu0 0.0
  %966 = vmatmul.mubr.f32.gmra.mrb[0].mxu0 %v841
  %v967 = vpop.f32.mrb[0].mxu0
  %v968 = vadd.f32 %v115, %v967
  %v969 = vpop.f32.mrb[0].mxu0
  %970 = vmatprep.mubr.f32.mxu0 0.0
  %971 = vmatmul.mubr.f32.gmra.mrb[0].mxu0 %v842
  %v972 = vpop.f32.mrb[0].mxu0
  %v973 = vadd.f32 %v115, %v972
  %v974 = vpop.f32.mrb[0].mxu0
  %975 = vmatprep.mubr.f32.mxu0 0.0
  %976 = vmatmul.mubr.f32.gmra.mrb[0].mxu0 %v843
  %v977 = vpop.f32.mrb[0].mxu0
  %v978 = vadd.f32 %v115, %v977
  %v979 = vpop.f32.mrb[0].mxu0
  %980 = vmatprep.mubr.f32.mxu0 0.0
  %981 = vmatmul.mubr.f32.gmra.mrb[0].mxu0 %v844
  %v982 = vpop.f32.mrb[0].mxu0
  %v983 = vadd.f32 %v115, %v982
  %v984 = vpop.f32.mrb[0].mxu0
  %985 = vmatprep.mubr.f32.mxu0 0.0
  %986 = vmatmul.mubr.f32.gmra.mrb[0].mxu0 %v845
  %v987 = vpop.f32.mrb[0].mxu0
  %v988 = vadd.f32 %v115, %v987
  %v989 = vpop.f32.mrb[0].mxu0
  %990 = vmatprep.mubr.f32.mxu0 0.0
  %991 = vmatmul.mubr.f32.gmra.mrb[0].mxu0 %v846
  %v992 = vpop.f32.mrb[0].mxu0
  %v993 = vadd.f32 %v115, %v992
  %v994 = vpop.f32.mrb[0].mxu0
  %995 = vmatprep.mubr.f32.mxu0 0.0
  %996 = vmatmul.mubr.f32.gmra.mrb[0].mxu0 %v847
  %v997 = vpop.f32.mrb[0].mxu0
  %v998 = vadd.f32 %v115, %v997
  %v999 = vpop.f32.mrb[0].mxu0
  %1000 = vmatprep.mubr.f32.mxu0 0.0
  %1001 = vmatmul.mubr.f32.gmra.mrb[0].mxu0 %v848
  %v1002 = vpop.f32.mrb[0].mxu0
  %v1003 = vadd.f32 %v115, %v1002
  %v1004 = vpop.f32.mrb[0].mxu0
  %1005 = vmatprep.mubr.f32.mxu0 0.0
  %1006 = vmatmul.mubr.f32.gmra.mrb[0].mxu0 %v849
  %v1007 = vpop.f32.mrb[0].mxu0
  %v1008 = vadd.f32 %v115, %v1007
  %v1009 = vpop.f32.mrb[0].mxu0
  %1010 = vmatprep.mubr.f32.mxu0 0.0
  %1011 = vmatmul.mubr.f32.gmra.mrb[0].mxu0 %v850
  %v1012 = vpop.f32.mrb[0].mxu0
  %v1013 = vadd.f32 %v115, %v1012
  %v1014 = vpop.f32.mrb[0].mxu0
  %1015 = vmatprep.mubr.f32.mxu0 0.0
  %1016 = vmatmul.mubr.f32.gmra.mrb[0].mxu0 %v851
  %v1017 = vpop.f32.mrb[0].mxu0
  %v1018 = vadd.f32 %v115, %v1017
  %v1019 = vpop.f32.mrb[0].mxu0
  %1020 = vmatprep.mubr.f32.mxu0 0.0
  %1021 = vmatmul.mubr.f32.gmra.mrb[0].mxu0 %v852
  %v1022 = vpop.f32.mrb[0].mxu0
  %v1023 = vadd.f32 %v115, %v1022
  %v1024 = vpop.f32.mrb[0].mxu0
  %1025 = vmatprep.mubr.f32.mxu0 0.0
  %1026 = vmatmul.mubr.f32.gmra.mrb[0].mxu0 %v853
  %v1027 = vpop.f32.mrb[0].mxu0
  %v1028 = vadd.f32 %v115, %v1027
  %v1029 = vpop.f32.mrb[0].mxu0
  %1030 = vmatprep.mubr.f32.mxu0 0.0
  %1031 = vmatmul.mubr.f32.gmra.mrb[0].mxu0 %v854
  %v1032 = vpop.f32.mrb[0].mxu0
  %v1033 = vadd.f32 %v115, %v1032
  %v1034 = vpop.f32.mrb[0].mxu0
  %1035 = vmatprep.mubr.f32.mxu0 0.0
  %1036 = vmatmul.mubr.f32.gmra.mrb[0].mxu0 %v855
  %v1037 = vpop.f32.mrb[0].mxu0
  %v1038 = vadd.f32 %v115, %v1037
  %v1039 = vpop.f32.mrb[0].mxu0
  %1040 = vmatprep.mubr.f32.mxu0 0.0
  %1041 = vmatmul.mubr.f32.gmra.mrb[0].mxu0 %v856
  %v1042 = vpop.f32.mrb[0].mxu0
  %v1043 = vadd.f32 %v115, %v1042
  %v1044 = vpop.f32.mrb[0].mxu0
  %1045 = vmatprep.mubr.f32.mxu0 0.0
  %1046 = vmatmul.mubr.f32.gmra.mrb[0].mxu0 %v857
  %v1047 = vpop.f32.mrb[0].mxu0
  %v1048 = vadd.f32 %v115, %v1047
  %v1049 = vpop.f32.mrb[0].mxu0
  %1050 = vmatprep.mubr.f32.mxu0 0.0
  %1051 = vmatmul.mubr.f32.gmra.mrb[0].mxu0 %v858
  %v1052 = vpop.f32.mrb[0].mxu0
  %v1053 = vadd.f32 %v115, %v1052
  %v1054 = vpop.f32.mrb[0].mxu0
  %1055 = vmatprep.mubr.f32.mxu0 0.0
  %1056 = vmatmul.mubr.f32.gmra.mrb[0].mxu0 %v859
  %v1057 = vpop.f32.mrb[0].mxu0
  %v1058 = vadd.f32 %v115, %v1057
  %v1059 = vpop.f32.mrb[0].mxu0
  %1060 = vmatprep.mubr.f32.mxu0 0.0
  %1061 = vmatmul.mubr.f32.gmra.mrb[0].mxu0 %v860
  %v1062 = vpop.f32.mrb[0].mxu0
  %v1063 = vadd.f32 %v115, %v1062
  %v1064 = vpop.f32.mrb[0].mxu0
  %1065 = vmatprep.mubr.f32.mxu0 0.0
  %1066 = vmatmul.mubr.f32.gmra.mrb[0].mxu0 %v861
  %v1067 = vpop.f32.mrb[0].mxu0
  %v1068 = vadd.f32 %v115, %v1067
  %v1069 = vpop.f32.mrb[0].mxu0
  %1070 = vmatprep.mubr.f32.mxu0 0.0
  %1071 = vmatmul.mubr.f32.gmra.mrb[0].mxu0 %v862
  %v1072 = vpop.f32.mrb[0].mxu0
  %v1073 = vadd.f32 %v115, %v1072
  %v1074 = vpop.f32.mrb[0].mxu0
  %1075 = vmatprep.mubr.f32.mxu0 0.0
  %1076 = vmatmul.mubr.f32.gmra.mrb[0].mxu0 %v863
  %v1077 = vpop.f32.mrb[0].mxu0
  %v1078 = vadd.f32 %v115, %v1077
  %v1079 = vpop.f32.mrb[0].mxu0
  %1080 = vmatprep.mubr.f32.mxu0 0.0
  %1081 = vmatmul.mubr.f32.gmra.mrb[0].mxu0 %v864
  %v1082 = vpop.f32.mrb[0].mxu0
  %v1083 = vadd.f32 %v115, %v1082
  %v1084 = vpop.f32.mrb[0].mxu0
  %1085 = vmatprep.mubr.f32.mxu0 0.0
  %1086 = vmatmul.mubr.f32.gmra.mrb[0].mxu0 %v865
  %v1087 = vpop.f32.mrb[0].mxu0
  %v1088 = vadd.f32 %v115, %v1087
  %v1089 = vpop.f32.mrb[0].mxu0
  %1090 = vdwg.mxu0
  %v1091 = vtanh.pop %v933
  %v1092 = vtanh.pop %v938
  %v1093 = vtanh.pop %v943
  %v1094 = vtanh.pop %v948
  %v1095 = vtanh.pop %v953
  %v1096 = vtanh.pop %v958
  %v1097 = vtanh.pop %v963
  %v1098 = vtanh.pop %v968
  %v1099 = vtanh.pop %v973
  %v1100 = vtanh.pop %v978
  %v1101 = vtanh.pop %v983
  %v1102 = vtanh.pop %v988
  %v1103 = vtanh.pop %v993
  %v1104 = vtanh.pop %v998
  %v1105 = vtanh.pop %v1003
  %v1106 = vtanh.pop %v1008
  %v1107 = vtanh.pop %v1013
  %v1108 = vtanh.pop %v1018
  %v1109 = vtanh.pop %v1023
  %v1110 = vtanh.pop %v1028
  %v1111 = vtanh.pop %v1033
  %v1112 = vtanh.pop %v1038
  %v1113 = vtanh.pop %v1043
  %v1114 = vtanh.pop %v1048
  %v1115 = vtanh.pop %v1053
  %v1116 = vtanh.pop %v1058
  %v1117 = vtanh.pop %v1063
  %v1118 = vtanh.pop %v1068
  %v1119 = vtanh.pop %v1073
  %v1120 = vtanh.pop %v1078
  %v1121 = vtanh.pop %v1083
  %v1122 = vtanh.pop %v1088
  %1123 = vmatprep.subr.mxu0 0.0
  %1124 = vmatpush1.msra.mxu0 %v1091
  %1125 = vmatprep.subr.mxu0 0.0
  %1126 = vmatpush1.msra.mxu0 %v1092
  %1127 = vmatprep.subr.mxu0 0.0
  %1128 = vmatpush1.msra.mxu0 %v1093
  %1129 = vmatprep.subr.mxu0 0.0
  %1130 = vmatpush1.msra.mxu0 %v1094
  %1131 = vmatprep.subr.mxu0 0.0
  %1132 = vmatpush1.msra.mxu0 %v1095
  %1133 = vmatprep.subr.mxu0 0.0
  %1134 = vmatpush1.msra.mxu0 %v1096
  %1135 = vmatprep.subr.mxu0 0.0
  %1136 = vmatpush1.msra.mxu0 %v1097
  %1137 = vmatprep.subr.mxu0 0.0
  %1138 = vmatpush1.msra.mxu0 %v1098
  %1139 = vmatprep.subr.mxu0 0.0
  %1140 = vmatpush1.msra.mxu0 %v1099
  %1141 = vmatprep.subr.mxu0 0.0
  %1142 = vmatpush1.msra.mxu0 %v1100
  %1143 = vmatprep.subr.mxu0 0.0
  %1144 = vmatpush1.msra.mxu0 %v1101
  %1145 = vmatprep.subr.mxu0 0.0
  %1146 = vmatpush1.msra.mxu0 %v1102
  %1147 = vmatprep.subr.mxu0 0.0
  %1148 = vmatpush1.msra.mxu0 %v1103
  %1149 = vmatprep.subr.mxu0 0.0
  %1150 = vmatpush1.msra.mxu0 %v1104
  %1151 = vmatprep.subr.mxu0 0.0
  %1152 = vmatpush1.msra.mxu0 %v1105
  %1153 = vmatprep.subr.mxu0 0.0
  %1154 = vmatpush1.msra.mxu0 %v1106
  %1155 = vmatprep.subr.mxu0 0.0
  %1156 = vmatpush1.msra.mxu0 %v1107
  %1157 = vmatprep.subr.mxu0 0.0
  %1158 = vmatpush1.msra.mxu0 %v1108
  %1159 = vmatprep.subr.mxu0 0.0
  %1160 = vmatpush1.msra.mxu0 %v1109
  %1161 = vmatprep.subr.mxu0 0.0
  %1162 = vmatpush1.msra.mxu0 %v1110
  %1163 = vmatprep.subr.mxu0 0.0
  %1164 = vmatpush1.msra.mxu0 %v1111
  %1165 = vmatprep.subr.mxu0 0.0
  %1166 = vmatpush1.msra.mxu0 %v1112
  %1167 = vmatprep.subr.mxu0 0.0
  %1168 = vmatpush1.msra.mxu0 %v1113
  %1169 = vmatprep.subr.mxu0 0.0
  %1170 = vmatpush1.msra.mxu0 %v1114
  %1171 = vmatprep.subr.mxu0 0.0
  %1172 = vmatpush1.msra.mxu0 %v1115
  %1173 = vmatprep.subr.mxu0 0.0
  %1174 = vmatpush1.msra.mxu0 %v1116
  %1175 = vmatprep.subr.mxu0 0.0
  %1176 = vmatpush1.msra.mxu0 %v1117
  %1177 = vmatprep.subr.mxu0 0.0
  %1178 = vmatpush1.msra.mxu0 %v1118
  %1179 = vmatprep.subr.mxu0 0.0
  %1180 = vmatpush1.msra.mxu0 %v1119
  %1181 = vmatprep.subr.mxu0 0.0
  %1182 = vmatpush1.msra.mxu0 %v1120
  %1183 = vmatprep.subr.mxu0 0.0
  %1184 = vmatpush1.msra.mxu0 %v1121
  %1185 = vmatprep.subr.mxu0 0.0
  %1186 = vmatpush1.msra.mxu0 %v1122
  %1187 = vmatprep.mubr.f32.mxu0 %v60
  %1188 = vmatmul.mubr.f32.gmra.mrb[0].mxu0 %v59
  %v1189 = vpop.f32.mrb[0].mxu0
  %v1190 = vadd.f32 0.0, %v1189
  %v1191 = vpop.f32.mrb[0].mxu0
  %1192 = vdwg.mxu0
  %v1193 = vmul.f32 %v1190, %v78
  %v1194 = vsel %vm445, %v1193, 0.0
  %1195 = vadd.xlane.f32.xlu0 %v1194
  %v1196 = vpop.xlane.xlu0 %1195
  %v1197 = vrot.slane %v1196, 4
  %v1198 = vadd.f32 %v1196, %v1197
  %v1199 = vrot.slane %v1198, 2
  %v1200 = vadd.f32 %v1198, %v1199
  %v1201 = vrot.slane %v1200, 1
  %v1202 = vadd.f32 %v1200, %v1201
  %s1203 = vtos %v1202
  %vm1204 = vcmp.eq.s32.totalorder %v50, 2
  %v1205 = vstv %s1203
  %v1206 = vsel %vm1204, %v1205, 0.0
  %v1207 = vadd.f32 %v833, %v1206
  %v1208 = vld [vmem:[%s39 + $0x18] sm:$0xff]
  %v1209 = vld [vmem:[%s39 + $0x38] sm:$0xff]
  %v1210 = vld [vmem:[%s39 + $0x58] sm:$0xff]
  %v1211 = vld [vmem:[%s39 + $0x78] sm:$0xff]
  %v1212 = vld [vmem:[%s39 + $0x98] sm:$0xff]
  %v1213 = vld [vmem:[%s39 + $0xb8] sm:$0xff]
  %v1214 = vld [vmem:[%s39 + $0xd8] sm:$0xff]
  %v1215 = vld [vmem:[%s39 + $0xf8] sm:$0xff]
  %v1216 = vld [vmem:[%s39 + $0x118] sm:$0xff]
  %v1217 = vld [vmem:[%s39 + $0x138] sm:$0xff]
  %v1218 = vld [vmem:[%s39 + $0x158] sm:$0xff]
  %v1219 = vld [vmem:[%s39 + $0x178] sm:$0xff]
  %v1220 = vld [vmem:[%s39 + $0x198] sm:$0xff]
  %v1221 = vld [vmem:[%s39 + $0x1b8] sm:$0xff]
  %v1222 = vld [vmem:[%s39 + $0x1d8] sm:$0xff]
  %v1223 = vld [vmem:[%s39 + $0x1f8] sm:$0xff]
  %v1224 = vld [vmem:[%s39 + $0x218] sm:$0xff]
  %v1225 = vld [vmem:[%s39 + $0x238] sm:$0xff]
  %v1226 = vld [vmem:[%s39 + $0x258] sm:$0xff]
  %v1227 = vld [vmem:[%s39 + $0x278] sm:$0xff]
  %v1228 = vld [vmem:[%s39 + $0x298] sm:$0xff]
  %v1229 = vld [vmem:[%s39 + $0x2b8] sm:$0xff]
  %v1230 = vld [vmem:[%s39 + $0x2d8] sm:$0xff]
  %v1231 = vld [vmem:[%s39 + $0x2f8] sm:$0xff]
  %v1232 = vld [vmem:[%s39 + $0x318] sm:$0xff]
  %v1233 = vld [vmem:[%s39 + $0x338] sm:$0xff]
  %v1234 = vld [vmem:[%s39 + $0x358] sm:$0xff]
  %v1235 = vld [vmem:[%s39 + $0x378] sm:$0xff]
  %v1236 = vld [vmem:[%s39 + $0x398] sm:$0xff]
  %v1237 = vld [vmem:[%s39 + $0x3b8] sm:$0xff]
  %v1238 = vld [vmem:[%s39 + $0x3d8] sm:$0xff]
  %v1239 = vld [vmem:[%s39 + $0x3f8] sm:$0xff]
  %1240 = vmatprep.subr.mxu0 0.0
  %1241 = vmatpush1.msra.mxu0 %v61
  %1242 = vmatprep.subr.mxu0 0.0
  %1243 = vmatpush1.msra.mxu0 %v62
  %1244 = vmatprep.subr.mxu0 0.0
  %1245 = vmatpush1.msra.mxu0 %v63
  %1246 = vmatprep.subr.mxu0 0.0
  %1247 = vmatpush1.msra.mxu0 %v64
  %1248 = vmatprep.subr.mxu0 0.0
  %1249 = vmatpush1.msra.mxu0 %v65
  %1250 = vmatprep.subr.mxu0 0.0
  %1251 = vmatpush1.msra.mxu0 %v66
  %1252 = vmatprep.subr.mxu0 0.0
  %1253 = vmatpush1.msra.mxu0 %v67
  %1254 = vmatprep.subr.mxu0 0.0
  %1255 = vmatpush1.msra.mxu0 %v68
  %1256 = vmatprep.subr.mxu0 0.0
  %1257 = vmatpush1.msra.mxu0 %v69
  %1258 = vmatprep.subr.mxu0 0.0
  %1259 = vmatpush1.msra.mxu0 %v70
  %1260 = vmatprep.subr.mxu0 0.0
  %1261 = vmatpush1.msra.mxu0 %v71
  %1262 = vmatprep.subr.mxu0 0.0
  %1263 = vmatpush1.msra.mxu0 %v72
  %1264 = vmatprep.subr.mxu0 0.0
  %1265 = vmatpush1.msra.mxu0 %v73
  %1266 = vmatprep.subr.mxu0 0.0
  %1267 = vmatpush1.msra.mxu0 %v74
  %1268 = vmatprep.subr.mxu0 0.0
  %1269 = vmatpush1.msra.mxu0 %v75
  %1270 = vmatprep.subr.mxu0 0.0
  %1271 = vmatpush1.msra.mxu0 %v76
  %1272 = vmatprep.subr.mxu0 0.0
  %1273 = vmatpush1.msra.mxu0 0.0
  %1274 = vmatprep.subr.mxu0 0.0
  %1275 = vmatpush1.msra.mxu0 0.0
  %1276 = vmatprep.subr.mxu0 0.0
  %1277 = vmatpush1.msra.mxu0 0.0
  %1278 = vmatprep.subr.mxu0 0.0
  %1279 = vmatpush1.msra.mxu0 0.0
  %1280 = vmatprep.subr.mxu0 0.0
  %1281 = vmatpush1.msra.mxu0 0.0
  %1282 = vmatprep.subr.mxu0 0.0
  %1283 = vmatpush1.msra.mxu0 0.0
  %1284 = vmatprep.subr.mxu0 0.0
  %1285 = vmatpush1.msra.mxu0 0.0
  %1286 = vmatprep.subr.mxu0 0.0
  %1287 = vmatpush1.msra.mxu0 0.0
  %1288 = vmatprep.subr.mxu0 0.0
  %1289 = vmatpush1.msra.mxu0 0.0
  %1290 = vmatprep.subr.mxu0 0.0
  %1291 = vmatpush1.msra.mxu0 0.0
  %1292 = vmatprep.subr.mxu0 0.0
  %1293 = vmatpush1.msra.mxu0 0.0
  %1294 = vmatprep.subr.mxu0 0.0
  %1295 = vmatpush1.msra.mxu0 0.0
  %1296 = vmatprep.subr.mxu0 0.0
  %1297 = vmatpush1.msra.mxu0 0.0
  %1298 = vmatprep.subr.mxu0 0.0
  %1299 = vmatpush1.msra.mxu0 0.0
  %1300 = vmatprep.subr.mxu0 0.0
  %1301 = vmatpush1.msra.mxu0 0.0
  %1302 = vmatprep.subr.mxu0 0.0
  %1303 = vmatpush1.msra.mxu0 0.0
  %1304 = vmatprep.mubr.f32.mxu0 0.0
  %1305 = vmatmul.mubr.f32.gmra.mrb[0].mxu0 %v1208
  %v1306 = vpop.f32.mrb[0].mxu0
  %v1307 = vadd.f32 %v115, %v1306
  %v1308 = vpop.f32.mrb[0].mxu0
  %1309 = vmatprep.mubr.f32.mxu0 0.0
  %1310 = vmatmul.mubr.f32.gmra.mrb[0].mxu0 %v1209
  %v1311 = vpop.f32.mrb[0].mxu0
  %v1312 = vadd.f32 %v115, %v1311
  %v1313 = vpop.f32.mrb[0].mxu0
  %1314 = vmatprep.mubr.f32.mxu0 0.0
  %1315 = vmatmul.mubr.f32.gmra.mrb[0].mxu0 %v1210
  %v1316 = vpop.f32.mrb[0].mxu0
  %v1317 = vadd.f32 %v115, %v1316
  %v1318 = vpop.f32.mrb[0].mxu0
  %1319 = vmatprep.mubr.f32.mxu0 0.0
  %1320 = vmatmul.mubr.f32.gmra.mrb[0].mxu0 %v1211
  %v1321 = vpop.f32.mrb[0].mxu0
  %v1322 = vadd.f32 %v115, %v1321
  %v1323 = vpop.f32.mrb[0].mxu0
  %1324 = vmatprep.mubr.f32.mxu0 0.0
  %1325 = vmatmul.mubr.f32.gmra.mrb[0].mxu0 %v1212
  %v1326 = vpop.f32.mrb[0].mxu0
  %v1327 = vadd.f32 %v115, %v1326
  %v1328 = vpop.f32.mrb[0].mxu0
  %1329 = vmatprep.mubr.f32.mxu0 0.0
  %1330 = vmatmul.mubr.f32.gmra.mrb[0].mxu0 %v1213
  %v1331 = vpop.f32.mrb[0].mxu0
  %v1332 = vadd.f32 %v115, %v1331
  %v1333 = vpop.f32.mrb[0].mxu0
  %1334 = vmatprep.mubr.f32.mxu0 0.0
  %1335 = vmatmul.mubr.f32.gmra.mrb[0].mxu0 %v1214
  %v1336 = vpop.f32.mrb[0].mxu0
  %v1337 = vadd.f32 %v115, %v1336
  %v1338 = vpop.f32.mrb[0].mxu0
  %1339 = vmatprep.mubr.f32.mxu0 0.0
  %1340 = vmatmul.mubr.f32.gmra.mrb[0].mxu0 %v1215
  %v1341 = vpop.f32.mrb[0].mxu0
  %v1342 = vadd.f32 %v115, %v1341
  %v1343 = vpop.f32.mrb[0].mxu0
  %1344 = vmatprep.mubr.f32.mxu0 0.0
  %1345 = vmatmul.mubr.f32.gmra.mrb[0].mxu0 %v1216
  %v1346 = vpop.f32.mrb[0].mxu0
  %v1347 = vadd.f32 %v115, %v1346
  %v1348 = vpop.f32.mrb[0].mxu0
  %1349 = vmatprep.mubr.f32.mxu0 0.0
  %1350 = vmatmul.mubr.f32.gmra.mrb[0].mxu0 %v1217
  %v1351 = vpop.f32.mrb[0].mxu0
  %v1352 = vadd.f32 %v115, %v1351
  %v1353 = vpop.f32.mrb[0].mxu0
  %1354 = vmatprep.mubr.f32.mxu0 0.0
  %1355 = vmatmul.mubr.f32.gmra.mrb[0].mxu0 %v1218
  %v1356 = vpop.f32.mrb[0].mxu0
  %v1357 = vadd.f32 %v115, %v1356
  %v1358 = vpop.f32.mrb[0].mxu0
  %1359 = vmatprep.mubr.f32.mxu0 0.0
  %1360 = vmatmul.mubr.f32.gmra.mrb[0].mxu0 %v1219
  %v1361 = vpop.f32.mrb[0].mxu0
  %v1362 = vadd.f32 %v115, %v1361
  %v1363 = vpop.f32.mrb[0].mxu0
  %1364 = vmatprep.mubr.f32.mxu0 0.0
  %1365 = vmatmul.mubr.f32.gmra.mrb[0].mxu0 %v1220
  %v1366 = vpop.f32.mrb[0].mxu0
  %v1367 = vadd.f32 %v115, %v1366
  %v1368 = vpop.f32.mrb[0].mxu0
  %1369 = vmatprep.mubr.f32.mxu0 0.0
  %1370 = vmatmul.mubr.f32.gmra.mrb[0].mxu0 %v1221
  %v1371 = vpop.f32.mrb[0].mxu0
  %v1372 = vadd.f32 %v115, %v1371
  %v1373 = vpop.f32.mrb[0].mxu0
  %1374 = vmatprep.mubr.f32.mxu0 0.0
  %1375 = vmatmul.mubr.f32.gmra.mrb[0].mxu0 %v1222
  %v1376 = vpop.f32.mrb[0].mxu0
  %v1377 = vadd.f32 %v115, %v1376
  %v1378 = vpop.f32.mrb[0].mxu0
  %1379 = vmatprep.mubr.f32.mxu0 0.0
  %1380 = vmatmul.mubr.f32.gmra.mrb[0].mxu0 %v1223
  %v1381 = vpop.f32.mrb[0].mxu0
  %v1382 = vadd.f32 %v115, %v1381
  %v1383 = vpop.f32.mrb[0].mxu0
  %1384 = vmatprep.mubr.f32.mxu0 0.0
  %1385 = vmatmul.mubr.f32.gmra.mrb[0].mxu0 %v1224
  %v1386 = vpop.f32.mrb[0].mxu0
  %v1387 = vadd.f32 %v115, %v1386
  %v1388 = vpop.f32.mrb[0].mxu0
  %1389 = vmatprep.mubr.f32.mxu0 0.0
  %1390 = vmatmul.mubr.f32.gmra.mrb[0].mxu0 %v1225
  %v1391 = vpop.f32.mrb[0].mxu0
  %v1392 = vadd.f32 %v115, %v1391
  %v1393 = vpop.f32.mrb[0].mxu0
  %1394 = vmatprep.mubr.f32.mxu0 0.0
  %1395 = vmatmul.mubr.f32.gmra.mrb[0].mxu0 %v1226
  %v1396 = vpop.f32.mrb[0].mxu0
  %v1397 = vadd.f32 %v115, %v1396
  %v1398 = vpop.f32.mrb[0].mxu0
  %1399 = vmatprep.mubr.f32.mxu0 0.0
  %1400 = vmatmul.mubr.f32.gmra.mrb[0].mxu0 %v1227
  %v1401 = vpop.f32.mrb[0].mxu0
  %v1402 = vadd.f32 %v115, %v1401
  %v1403 = vpop.f32.mrb[0].mxu0
  %1404 = vmatprep.mubr.f32.mxu0 0.0
  %1405 = vmatmul.mubr.f32.gmra.mrb[0].mxu0 %v1228
  %v1406 = vpop.f32.mrb[0].mxu0
  %v1407 = vadd.f32 %v115, %v1406
  %v1408 = vpop.f32.mrb[0].mxu0
  %1409 = vmatprep.mubr.f32.mxu0 0.0
  %1410 = vmatmul.mubr.f32.gmra.mrb[0].mxu0 %v1229
  %v1411 = vpop.f32.mrb[0].mxu0
  %v1412 = vadd.f32 %v115, %v1411
  %v1413 = vpop.f32.mrb[0].mxu0
  %1414 = vmatprep.mubr.f32.mxu0 0.0
  %1415 = vmatmul.mubr.f32.gmra.mrb[0].mxu0 %v1230
  %v1416 = vpop.f32.mrb[0].mxu0
  %v1417 = vadd.f32 %v115, %v1416
  %v1418 = vpop.f32.mrb[0].mxu0
  %1419 = vmatprep.mubr.f32.mxu0 0.0
  %1420 = vmatmul.mubr.f32.gmra.mrb[0].mxu0 %v1231
  %v1421 = vpop.f32.mrb[0].mxu0
  %v1422 = vadd.f32 %v115, %v1421
  %v1423 = vpop.f32.mrb[0].mxu0
  %1424 = vmatprep.mubr.f32.mxu0 0.0
  %1425 = vmatmul.mubr.f32.gmra.mrb[0].mxu0 %v1232
  %v1426 = vpop.f32.mrb[0].mxu0
  %v1427 = vadd.f32 %v115, %v1426
  %v1428 = vpop.f32.mrb[0].mxu0
  %1429 = vmatprep.mubr.f32.mxu0 0.0
  %1430 = vmatmul.mubr.f32.gmra.mrb[0].mxu0 %v1233
  %v1431 = vpop.f32.mrb[0].mxu0
  %v1432 = vadd.f32 %v115, %v1431
  %v1433 = vpop.f32.mrb[0].mxu0
  %1434 = vmatprep.mubr.f32.mxu0 0.0
  %1435 = vmatmul.mubr.f32.gmra.mrb[0].mxu0 %v1234
  %v1436 = vpop.f32.mrb[0].mxu0
  %v1437 = vadd.f32 %v115, %v1436
  %v1438 = vpop.f32.mrb[0].mxu0
  %1439 = vmatprep.mubr.f32.mxu0 0.0
  %1440 = vmatmul.mubr.f32.gmra.mrb[0].mxu0 %v1235
  %v1441 = vpop.f32.mrb[0].mxu0
  %v1442 = vadd.f32 %v115, %v1441
  %v1443 = vpop.f32.mrb[0].mxu0
  %1444 = vmatprep.mubr.f32.mxu0 0.0
  %1445 = vmatmul.mubr.f32.gmra.mrb[0].mxu0 %v1236
  %v1446 = vpop.f32.mrb[0].mxu0
  %v1447 = vadd.f32 %v115, %v1446
  %v1448 = vpop.f32.mrb[0].mxu0
  %1449 = vmatprep.mubr.f32.mxu0 0.0
  %1450 = vmatmul.mubr.f32.gmra.mrb[0].mxu0 %v1237
  %v1451 = vpop.f32.mrb[0].mxu0
  %v1452 = vadd.f32 %v115, %v1451
  %v1453 = vpop.f32.mrb[0].mxu0
  %1454 = vmatprep.mubr.f32.mxu0 0.0
  %1455 = vmatmul.mubr.f32.gmra.mrb[0].mxu0 %v1238
  %v1456 = vpop.f32.mrb[0].mxu0
  %v1457 = vadd.f32 %v115, %v1456
  %v1458 = vpop.f32.mrb[0].mxu0
  %1459 = vmatprep.mubr.f32.mxu0 0.0
  %1460 = vmatmul.mubr.f32.gmra.mrb[0].mxu0 %v1239
  %v1461 = vpop.f32.mrb[0].mxu0
  %v1462 = vadd.f32 %v115, %v1461
  %v1463 = vpop.f32.mrb[0].mxu0
  %1464 = vdwg.mxu0
  %v1465 = vtanh.pop %v1307
  %v1466 = vtanh.pop %v1312
  %v1467 = vtanh.pop %v1317
  %v1468 = vtanh.pop %v1322
  %v1469 = vtanh.pop %v1327
  %v1470 = vtanh.pop %v1332
  %v1471 = vtanh.pop %v1337
  %v1472 = vtanh.pop %v1342
  %v1473 = vtanh.pop %v1347
  %v1474 = vtanh.pop %v1352
  %v1475 = vtanh.pop %v1357
  %v1476 = vtanh.pop %v1362
  %v1477 = vtanh.pop %v1367
  %v1478 = vtanh.pop %v1372
  %v1479 = vtanh.pop %v1377
  %v1480 = vtanh.pop %v1382
  %v1481 = vtanh.pop %v1387
  %v1482 = vtanh.pop %v1392
  %v1483 = vtanh.pop %v1397
  %v1484 = vtanh.pop %v1402
  %v1485 = vtanh.pop %v1407
  %v1486 = vtanh.pop %v1412
  %v1487 = vtanh.pop %v1417
  %v1488 = vtanh.pop %v1422
  %v1489 = vtanh.pop %v1427
  %v1490 = vtanh.pop %v1432
  %v1491 = vtanh.pop %v1437
  %v1492 = vtanh.pop %v1442
  %v1493 = vtanh.pop %v1447
  %v1494 = vtanh.pop %v1452
  %v1495 = vtanh.pop %v1457
  %v1496 = vtanh.pop %v1462
  %1497 = vmatprep.subr.mxu0 0.0
  %1498 = vmatpush1.msra.mxu0 %v1465
  %1499 = vmatprep.subr.mxu0 0.0
  %1500 = vmatpush1.msra.mxu0 %v1466
  %1501 = vmatprep.subr.mxu0 0.0
  %1502 = vmatpush1.msra.mxu0 %v1467
  %1503 = vmatprep.subr.mxu0 0.0
  %1504 = vmatpush1.msra.mxu0 %v1468
  %1505 = vmatprep.subr.mxu0 0.0
  %1506 = vmatpush1.msra.mxu0 %v1469
  %1507 = vmatprep.subr.mxu0 0.0
  %1508 = vmatpush1.msra.mxu0 %v1470
  %1509 = vmatprep.subr.mxu0 0.0
  %1510 = vmatpush1.msra.mxu0 %v1471
  %1511 = vmatprep.subr.mxu0 0.0
  %1512 = vmatpush1.msra.mxu0 %v1472
  %1513 = vmatprep.subr.mxu0 0.0
  %1514 = vmatpush1.msra.mxu0 %v1473
  %1515 = vmatprep.subr.mxu0 0.0
  %1516 = vmatpush1.msra.mxu0 %v1474
  %1517 = vmatprep.subr.mxu0 0.0
  %1518 = vmatpush1.msra.mxu0 %v1475
  %1519 = vmatprep.subr.mxu0 0.0
  %1520 = vmatpush1.msra.mxu0 %v1476
  %1521 = vmatprep.subr.mxu0 0.0
  %1522 = vmatpush1.msra.mxu0 %v1477
  %1523 = vmatprep.subr.mxu0 0.0
  %1524 = vmatpush1.msra.mxu0 %v1478
  %1525 = vmatprep.subr.mxu0 0.0
  %1526 = vmatpush1.msra.mxu0 %v1479
  %1527 = vmatprep.subr.mxu0 0.0
  %1528 = vmatpush1.msra.mxu0 %v1480
  %1529 = vmatprep.subr.mxu0 0.0
  %1530 = vmatpush1.msra.mxu0 %v1481
  %1531 = vmatprep.subr.mxu0 0.0
  %1532 = vmatpush1.msra.mxu0 %v1482
  %1533 = vmatprep.subr.mxu0 0.0
  %1534 = vmatpush1.msra.mxu0 %v1483
  %1535 = vmatprep.subr.mxu0 0.0
  %1536 = vmatpush1.msra.mxu0 %v1484
  %1537 = vmatprep.subr.mxu0 0.0
  %1538 = vmatpush1.msra.mxu0 %v1485
  %1539 = vmatprep.subr.mxu0 0.0
  %1540 = vmatpush1.msra.mxu0 %v1486
  %1541 = vmatprep.subr.mxu0 0.0
  %1542 = vmatpush1.msra.mxu0 %v1487
  %1543 = vmatprep.subr.mxu0 0.0
  %1544 = vmatpush1.msra.mxu0 %v1488
  %1545 = vmatprep.subr.mxu0 0.0
  %1546 = vmatpush1.msra.mxu0 %v1489
  %1547 = vmatprep.subr.mxu0 0.0
  %1548 = vmatpush1.msra.mxu0 %v1490
  %1549 = vmatprep.subr.mxu0 0.0
  %1550 = vmatpush1.msra.mxu0 %v1491
  %1551 = vmatprep.subr.mxu0 0.0
  %1552 = vmatpush1.msra.mxu0 %v1492
  %1553 = vmatprep.subr.mxu0 0.0
  %1554 = vmatpush1.msra.mxu0 %v1493
  %1555 = vmatprep.subr.mxu0 0.0
  %1556 = vmatpush1.msra.mxu0 %v1494
  %1557 = vmatprep.subr.mxu0 0.0
  %1558 = vmatpush1.msra.mxu0 %v1495
  %1559 = vmatprep.subr.mxu0 0.0
  %1560 = vmatpush1.msra.mxu0 %v1496
  %1561 = vmatprep.mubr.f32.mxu0 %v60
  %1562 = vmatmul.mubr.f32.gmra.mrb[0].mxu0 %v59
  %v1563 = vpop.f32.mrb[0].mxu0
  %v1564 = vadd.f32 0.0, %v1563
  %v1565 = vpop.f32.mrb[0].mxu0
  %1566 = vdwg.mxu0
  %v1567 = vmul.f32 %v1564, %v78
  %v1568 = vsel %vm445, %v1567, 0.0
  %1569 = vadd.xlane.f32.xlu0 %v1568
  %v1570 = vpop.xlane.xlu0 %1569
  %v1571 = vrot.slane %v1570, 4
  %v1572 = vadd.f32 %v1570, %v1571
  %v1573 = vrot.slane %v1572, 2
  %v1574 = vadd.f32 %v1572, %v1573
  %v1575 = vrot.slane %v1574, 1
  %v1576 = vadd.f32 %v1574, %v1575
  %s1577 = vtos %v1576
  %vm1578 = vcmp.eq.s32.totalorder %v50, 3
  %v1579 = vstv %s1577
  %v1580 = vsel %vm1578, %v1579, 0.0
  %v1581 = vadd.f32 %v1207, %v1580
  %v1582 = vld [vmem:[%s4] sm:$0xff]
  %v1583 = vadd.f32 %v1582, %v1581
  %1584 = vst [vmem:[%s4] sm:$0xff] %v1583
  // Predicated region
  $region22: #{semantic_attention_forward.2} parent=0 // pred_check
    _
  $region23: #{semantic_attention_forward.2} parent=0 // pred_check_branch
    %1586 = sbr.rel (0) target = $region25
  $region24: #{semantic_attention_forward.2} parent=0 // pred_region
    _
  $region25: #{semantic_attention_forward.2} parent=0 // pred_fallthru
    _
  // Predicated region
  $region26: #{semantic_attention_forward.2} parent=0 // pred_check
    _
  $region27: #{semantic_attention_forward.2} parent=0 // pred_check_branch
    %1588 = sbr.rel (0) target = $region29
  $region28: #{semantic_attention_forward.2} parent=0 // pred_region
    _
  $region29: #{semantic_attention_forward.2} parent=0 // pred_fallthru
    _

// kernel: semantic_attention_forward.3
$region0: #{semantic_attention_forward.3}
  #allocation0 [shape = 'u32[]', space=smem, size = 0x4, offset = 0x4, fixed_abs, tag = 'smem constant byte address 0x4 - core index']
  #allocation1 [shape = 'u32[144,128]{1,0:T(1,128)}', space=vmem, size = 0x12000, scoped, tag = 'internal scratch']
  %s0 = inlined_call_operand.vmem [shape: f32[4], index: 0, kind: input, shape index: {}]
  %s1 = inlined_call_operand.vmem [shape: f32[256,512], index: 1, kind: input, shape index: {}]
  %s2 = inlined_call_operand.hbm [shape: f32[256,128], index: 2, kind: output, shape index: {}]
  %s3 = sld [smem:[#allocation0]]
  $region22: #{semantic_attention_forward.3} parent=0
    _
  %s5 = ssub.s32 1, %s3
  %s6 = scalar_select 0, %s5, %s3
  $region1: #{semantic_attention_forward.3} parent=0
    #allocation2 [shape = 'u8[512]{0}', space=smem, size = 0x200, scoped, tag = 'input window, operand 0, single buffered']
    #allocation3 [shape = 's32[1]{0}', space=sflag, size = 0x4, scoped, tag = 'scoped memory for semantic_attention_forward.3']
    #allocation4 [shape = 's32[1]{0}', space=sflag, size = 0x4, scoped, tag = 'scoped memory for semantic_attention_forward.3']
    #allocation5 [shape = 'u8[131072]{0}', space=vmem, size = 0x20000, scoped, tag = 'output window, operand 0, single buffered']
    %7 = vsyncpa [#allocation4], 0
    %8 = vsyncpa [#allocation3], 0
    // Predicated region
    $region2: #{semantic_attention_forward.3} parent=1 // pred_check
      _
    $region3: #{semantic_attention_forward.3} parent=1 // pred_check_branch
      %10 = sbr.rel (0) target = $region5
    $region4: #{semantic_attention_forward.3} parent=1 // pred_region
      %s12 = ssub.s32 16, 16
      %13 = vsyncadd [#allocation4], %s12
      %s15 = sshll.u32 %s0, 4
      %s16 = int_to_ptr.vmem [resolvable:$true] %s15
      %18 = dma.vmem_to_smem %s16, 16, [#allocation2], [#allocation4]
    $region5: #{semantic_attention_forward.3} parent=1 // pred_fallthru
      _
    // Predicated region
    $region6: #{semantic_attention_forward.3} parent=1 // pred_check
      _
    $region7: #{semantic_attention_forward.3} parent=1 // pred_check_branch
      %20 = sbr.rel (0) target = $region9
    $region8: #{semantic_attention_forward.3} parent=1 // pred_region
      _
    $region9: #{semantic_attention_forward.3} parent=1 // pred_fallthru
      _
    // Predicated region
    $region10: #{semantic_attention_forward.3} parent=1 // pred_check
      _
    $region11: #{semantic_attention_forward.3} parent=1 // pred_check_branch
      %22 = sbr.rel (0) target = $region13
    $region12: #{semantic_attention_forward.3} parent=1 // pred_region
      %23 = dma.done [#allocation4], 16
    $region13: #{semantic_attention_forward.3} parent=1 // pred_fallthru
      _
    %24 = sfence
    %s25 = sld [smem:[#allocation2]]
    %v26 = vld [vmem:[%s1] sm:$0xff]
    %v27 = vld [vmem:[%s1 + $0x20] sm:$0xff]
    %v28 = vld [vmem:[%s1 + $0x40] sm:$0xff]
    %v29 = vld [vmem:[%s1 + $0x60] sm:$0xff]
    %v30 = vld [vmem:[%s1 + $0x80] sm:$0xff]
    %v31 = vld [vmem:[%s1 + $0xa0] sm:$0xff]
    %v32 = vld [vmem:[%s1 + $0xc0] sm:$0xff]
    %v33 = vld [vmem:[%s1 + $0xe0] sm:$0xff]
    %v34 = vld [vmem:[%s1 + $0x100] sm:$0xff]
    %v35 = vld [vmem:[%s1 + $0x120] sm:$0xff]
    %v36 = vld [vmem:[%s1 + $0x140] sm:$0xff]
    %v37 = vld [vmem:[%s1 + $0x160] sm:$0xff]
    %v38 = vld [vmem:[%s1 + $0x180] sm:$0xff]
    %v39 = vld [vmem:[%s1 + $0x1a0] sm:$0xff]
    %v40 = vld [vmem:[%s1 + $0x1c0] sm:$0xff]
    %v41 = vld [vmem:[%s1 + $0x1e0] sm:$0xff]
    %v42 = vld [vmem:[%s1 + $0x200] sm:$0xff]
    %v43 = vld [vmem:[%s1 + $0x220] sm:$0xff]
    %v44 = vld [vmem:[%s1 + $0x240] sm:$0xff]
    %v45 = vld [vmem:[%s1 + $0x260] sm:$0xff]
    %v46 = vld [vmem:[%s1 + $0x280] sm:$0xff]
    %v47 = vld [vmem:[%s1 + $0x2a0] sm:$0xff]
    %v48 = vld [vmem:[%s1 + $0x2c0] sm:$0xff]
    %v49 = vld [vmem:[%s1 + $0x2e0] sm:$0xff]
    %v50 = vld [vmem:[%s1 + $0x300] sm:$0xff]
    %v51 = vld [vmem:[%s1 + $0x320] sm:$0xff]
    %v52 = vld [vmem:[%s1 + $0x340] sm:$0xff]
    %v53 = vld [vmem:[%s1 + $0x360] sm:$0xff]
    %v54 = vld [vmem:[%s1 + $0x380] sm:$0xff]
    %v55 = vld [vmem:[%s1 + $0x3a0] sm:$0xff]
    %v56 = vld [vmem:[%s1 + $0x3c0] sm:$0xff]
    %v57 = vld [vmem:[%s1 + $0x3e0] sm:$0xff]
    %v58 = vstv %s25
    %v59 = vmul.f32 %v58, %v26
    %v60 = vmul.f32 %v58, %v27
    %v61 = vmul.f32 %v58, %v28
    %v62 = vmul.f32 %v58, %v29
    %v63 = vmul.f32 %v58, %v30
    %v64 = vmul.f32 %v58, %v31
    %v65 = vmul.f32 %v58, %v32
    %v66 = vmul.f32 %v58, %v33
    %v67 = vmul.f32 %v58, %v34
    %v68 = vmul.f32 %v58, %v35
    %v69 = vmul.f32 %v58, %v36
    %v70 = vmul.f32 %v58, %v37
    %v71 = vmul.f32 %v58, %v38
    %v72 = vmul.f32 %v58, %v39
    %v73 = vmul.f32 %v58, %v40
    %v74 = vmul.f32 %v58, %v41
    %v75 = vmul.f32 %v58, %v42
    %v76 = vmul.f32 %v58, %v43
    %v77 = vmul.f32 %v58, %v44
    %v78 = vmul.f32 %v58, %v45
    %v79 = vmul.f32 %v58, %v46
    %v80 = vmul.f32 %v58, %v47
    %v81 = vmul.f32 %v58, %v48
    %v82 = vmul.f32 %v58, %v49
    %v83 = vmul.f32 %v58, %v50
    %v84 = vmul.f32 %v58, %v51
    %v85 = vmul.f32 %v58, %v52
    %v86 = vmul.f32 %v58, %v53
    %v87 = vmul.f32 %v58, %v54
    %v88 = vmul.f32 %v58, %v55
    %v89 = vmul.f32 %v58, %v56
    %v90 = vmul.f32 %v58, %v57
    %s91 = sld [smem:[#allocation2 + $0x1]]
    %v92 = vld [vmem:[%s1 + $0x8] sm:$0xff]
    %v93 = vld [vmem:[%s1 + $0x28] sm:$0xff]
    %v94 = vld [vmem:[%s1 + $0x48] sm:$0xff]
    %v95 = vld [vmem:[%s1 + $0x68] sm:$0xff]
    %v96 = vld [vmem:[%s1 + $0x88] sm:$0xff]
    %v97 = vld [vmem:[%s1 + $0xa8] sm:$0xff]
    %v98 = vld [vmem:[%s1 + $0xc8] sm:$0xff]
    %v99 = vld [vmem:[%s1 + $0xe8] sm:$0xff]
    %v100 = vld [vmem:[%s1 + $0x108] sm:$0xff]
    %v101 = vld [vmem:[%s1 + $0x128] sm:$0xff]
    %v102 = vld [vmem:[%s1 + $0x148] sm:$0xff]
    %v103 = vld [vmem:[%s1 + $0x168] sm:$0xff]
    %v104 = vld [vmem:[%s1 + $0x188] sm:$0xff]
    %v105 = vld [vmem:[%s1 + $0x1a8] sm:$0xff]
    %v106 = vld [vmem:[%s1 + $0x1c8] sm:$0xff]
    %v107 = vld [vmem:[%s1 + $0x1e8] sm:$0xff]
    %v108 = vld [vmem:[%s1 + $0x208] sm:$0xff]
    %v109 = vld [vmem:[%s1 + $0x228] sm:$0xff]
    %v110 = vld [vmem:[%s1 + $0x248] sm:$0xff]
    %v111 = vld [vmem:[%s1 + $0x268] sm:$0xff]
    %v112 = vld [vmem:[%s1 + $0x288] sm:$0xff]
    %v113 = vld [vmem:[%s1 + $0x2a8] sm:$0xff]
    %v114 = vld [vmem:[%s1 + $0x2c8] sm:$0xff]
    %v115 = vld [vmem:[%s1 + $0x2e8] sm:$0xff]
    %v116 = vld [vmem:[%s1 + $0x308] sm:$0xff]
    %v117 = vld [vmem:[%s1 + $0x328] sm:$0xff]
    %v118 = vld [vmem:[%s1 + $0x348] sm:$0xff]
    %v119 = vld [vmem:[%s1 + $0x368] sm:$0xff]
    %v120 = vld [vmem:[%s1 + $0x388] sm:$0xff]
    %v121 = vld [vmem:[%s1 + $0x3a8] sm:$0xff]
    %v122 = vld [vmem:[%s1 + $0x3c8] sm:$0xff]
    %v123 = vld [vmem:[%s1 + $0x3e8] sm:$0xff]
    %v124 = vstv %s91
    %v125 = vmul.f32 %v124, %v92
    %v126 = vmul.f32 %v124, %v93
    %v127 = vmul.f32 %v124, %v94
    %v128 = vmul.f32 %v124, %v95
    %v129 = vmul.f32 %v124, %v96
    %v130 = vmul.f32 %v124, %v97
    %v131 = vmul.f32 %v124, %v98
    %v132 = vmul.f32 %v124, %v99
    %v133 = vmul.f32 %v124, %v100
    %v134 = vmul.f32 %v124, %v101
    %v135 = vmul.f32 %v124, %v102
    %v136 = vmul.f32 %v124, %v103
    %v137 = vmul.f32 %v124, %v104
    %v138 = vmul.f32 %v124, %v105
    %v139 = vmul.f32 %v124, %v106
    %v140 = vmul.f32 %v124, %v107
    %v141 = vmul.f32 %v124, %v108
    %v142 = vmul.f32 %v124, %v109
    %v143 = vmul.f32 %v124, %v110
    %v144 = vmul.f32 %v124, %v111
    %v145 = vmul.f32 %v124, %v112
    %v146 = vmul.f32 %v124, %v113
    %v147 = vmul.f32 %v124, %v114
    %v148 = vmul.f32 %v124, %v115
    %v149 = vmul.f32 %v124, %v116
    %v150 = vmul.f32 %v124, %v117
    %v151 = vmul.f32 %v124, %v118
    %v152 = vmul.f32 %v124, %v119
    %v153 = vmul.f32 %v124, %v120
    %v154 = vmul.f32 %v124, %v121
    %v155 = vmul.f32 %v124, %v122
    %v156 = vmul.f32 %v124, %v123
    %v157 = vadd.f32 %v59, %v125
    %v158 = vadd.f32 %v60, %v126
    %v159 = vadd.f32 %v61, %v127
    %v160 = vadd.f32 %v62, %v128
    %v161 = vadd.f32 %v63, %v129
    %v162 = vadd.f32 %v64, %v130
    %v163 = vadd.f32 %v65, %v131
    %v164 = vadd.f32 %v66, %v132
    %v165 = vadd.f32 %v67, %v133
    %v166 = vadd.f32 %v68, %v134
    %v167 = vadd.f32 %v69, %v135
    %v168 = vadd.f32 %v70, %v136
    %v169 = vadd.f32 %v71, %v137
    %v170 = vadd.f32 %v72, %v138
    %v171 = vadd.f32 %v73, %v139
    %v172 = vadd.f32 %v74, %v140
    %v173 = vadd.f32 %v75, %v141
    %v174 = vadd.f32 %v76, %v142
    %v175 = vadd.f32 %v77, %v143
    %v176 = vadd.f32 %v78, %v144
    %v177 = vadd.f32 %v79, %v145
    %v178 = vadd.f32 %v80, %v146
    %v179 = vadd.f32 %v81, %v147
    %v180 = vadd.f32 %v82, %v148
    %v181 = vadd.f32 %v83, %v149
    %v182 = vadd.f32 %v84, %v150
    %v183 = vadd.f32 %v85, %v151
    %v184 = vadd.f32 %v86, %v152
    %v185 = vadd.f32 %v87, %v153
    %v186 = vadd.f32 %v88, %v154
    %v187 = vadd.f32 %v89, %v155
    %v188 = vadd.f32 %v90, %v156
    %s189 = sld [smem:[#allocation2 + $0x2]]
    %v190 = vld [vmem:[%s1 + $0x10] sm:$0xff]
    %v191 = vld [vmem:[%s1 + $0x30] sm:$0xff]
    %v192 = vld [vmem:[%s1 + $0x50] sm:$0xff]
    %v193 = vld [vmem:[%s1 + $0x70] sm:$0xff]
    %v194 = vld [vmem:[%s1 + $0x90] sm:$0xff]
    %v195 = vld [vmem:[%s1 + $0xb0] sm:$0xff]
    %v196 = vld [vmem:[%s1 + $0xd0] sm:$0xff]
    %v197 = vld [vmem:[%s1 + $0xf0] sm:$0xff]
    %v198 = vld [vmem:[%s1 + $0x110] sm:$0xff]
    %v199 = vld [vmem:[%s1 + $0x130] sm:$0xff]
    %v200 = vld [vmem:[%s1 + $0x150] sm:$0xff]
    %v201 = vld [vmem:[%s1 + $0x170] sm:$0xff]
    %v202 = vld [vmem:[%s1 + $0x190] sm:$0xff]
    %v203 = vld [vmem:[%s1 + $0x1b0] sm:$0xff]
    %v204 = vld [vmem:[%s1 + $0x1d0] sm:$0xff]
    %v205 = vld [vmem:[%s1 + $0x1f0] sm:$0xff]
    %v206 = vld [vmem:[%s1 + $0x210] sm:$0xff]
    %v207 = vld [vmem:[%s1 + $0x230] sm:$0xff]
    %v208 = vld [vmem:[%s1 + $0x250] sm:$0xff]
    %v209 = vld [vmem:[%s1 + $0x270] sm:$0xff]
    %v210 = vld [vmem:[%s1 + $0x290] sm:$0xff]
    %v211 = vld [vmem:[%s1 + $0x2b0] sm:$0xff]
    %v212 = vld [vmem:[%s1 + $0x2d0] sm:$0xff]
    %v213 = vld [vmem:[%s1 + $0x2f0] sm:$0xff]
    %v214 = vld [vmem:[%s1 + $0x310] sm:$0xff]
    %v215 = vld [vmem:[%s1 + $0x330] sm:$0xff]
    %v216 = vld [vmem:[%s1 + $0x350] sm:$0xff]
    %v217 = vld [vmem:[%s1 + $0x370] sm:$0xff]
    %v218 = vld [vmem:[%s1 + $0x390] sm:$0xff]
    %v219 = vld [vmem:[%s1 + $0x3b0] sm:$0xff]
    %v220 = vld [vmem:[%s1 + $0x3d0] sm:$0xff]
    %v221 = vld [vmem:[%s1 + $0x3f0] sm:$0xff]
    %v222 = vstv %s189
    %v223 = vmul.f32 %v222, %v190
    %v224 = vmul.f32 %v222, %v191
    %v225 = vmul.f32 %v222, %v192
    %v226 = vmul.f32 %v222, %v193
    %v227 = vmul.f32 %v222, %v194
    %v228 = vmul.f32 %v222, %v195
    %v229 = vmul.f32 %v222, %v196
    %v230 = vmul.f32 %v222, %v197
    %v231 = vmul.f32 %v222, %v198
    %v232 = vmul.f32 %v222, %v199
    %v233 = vmul.f32 %v222, %v200
    %v234 = vmul.f32 %v222, %v201
    %v235 = vmul.f32 %v222, %v202
    %v236 = vmul.f32 %v222, %v203
    %v237 = vmul.f32 %v222, %v204
    %v238 = vmul.f32 %v222, %v205
    %v239 = vmul.f32 %v222, %v206
    %v240 = vmul.f32 %v222, %v207
    %v241 = vmul.f32 %v222, %v208
    %v242 = vmul.f32 %v222, %v209
    %v243 = vmul.f32 %v222, %v210
    %v244 = vmul.f32 %v222, %v211
    %v245 = vmul.f32 %v222, %v212
    %v246 = vmul.f32 %v222, %v213
    %v247 = vmul.f32 %v222, %v214
    %v248 = vmul.f32 %v222, %v215
    %v249 = vmul.f32 %v222, %v216
    %v250 = vmul.f32 %v222, %v217
    %v251 = vmul.f32 %v222, %v218
    %v252 = vmul.f32 %v222, %v219
    %v253 = vmul.f32 %v222, %v220
    %v254 = vmul.f32 %v222, %v221
    %v255 = vadd.f32 %v157, %v223
    %v256 = vadd.f32 %v158, %v224
    %v257 = vadd.f32 %v159, %v225
    %v258 = vadd.f32 %v160, %v226
    %v259 = vadd.f32 %v161, %v227
    %v260 = vadd.f32 %v162, %v228
    %v261 = vadd.f32 %v163, %v229
    %v262 = vadd.f32 %v164, %v230
    %v263 = vadd.f32 %v165, %v231
    %v264 = vadd.f32 %v166, %v232
    %v265 = vadd.f32 %v167, %v233
    %v266 = vadd.f32 %v168, %v234
    %v267 = vadd.f32 %v169, %v235
    %v268 = vadd.f32 %v170, %v236
    %v269 = vadd.f32 %v171, %v237
    %v270 = vadd.f32 %v172, %v238
    %v271 = vadd.f32 %v173, %v239
    %v272 = vadd.f32 %v174, %v240
    %v273 = vadd.f32 %v175, %v241
    %v274 = vadd.f32 %v176, %v242
    %v275 = vadd.f32 %v177, %v243
    %v276 = vadd.f32 %v178, %v244
    %v277 = vadd.f32 %v179, %v245
    %v278 = vadd.f32 %v180, %v246
    %v279 = vadd.f32 %v181, %v247
    %v280 = vadd.f32 %v182, %v248
    %v281 = vadd.f32 %v183, %v249
    %v282 = vadd.f32 %v184, %v250
    %v283 = vadd.f32 %v185, %v251
    %v284 = vadd.f32 %v186, %v252
    %v285 = vadd.f32 %v187, %v253
    %v286 = vadd.f32 %v188, %v254
    %s287 = sld [smem:[#allocation2 + $0x3]]
    %v288 = vld [vmem:[%s1 + $0x18] sm:$0xff]
    %v289 = vld [vmem:[%s1 + $0x38] sm:$0xff]
    %v290 = vld [vmem:[%s1 + $0x58] sm:$0xff]
    %v291 = vld [vmem:[%s1 + $0x78] sm:$0xff]
    %v292 = vld [vmem:[%s1 + $0x98] sm:$0xff]
    %v293 = vld [vmem:[%s1 + $0xb8] sm:$0xff]
    %v294 = vld [vmem:[%s1 + $0xd8] sm:$0xff]
    %v295 = vld [vmem:[%s1 + $0xf8] sm:$0xff]
    %v296 = vld [vmem:[%s1 + $0x118] sm:$0xff]
    %v297 = vld [vmem:[%s1 + $0x138] sm:$0xff]
    %v298 = vld [vmem:[%s1 + $0x158] sm:$0xff]
    %v299 = vld [vmem:[%s1 + $0x178] sm:$0xff]
    %v300 = vld [vmem:[%s1 + $0x198] sm:$0xff]
    %v301 = vld [vmem:[%s1 + $0x1b8] sm:$0xff]
    %v302 = vld [vmem:[%s1 + $0x1d8] sm:$0xff]
    %v303 = vld [vmem:[%s1 + $0x1f8] sm:$0xff]
    %v304 = vld [vmem:[%s1 + $0x218] sm:$0xff]
    %v305 = vld [vmem:[%s1 + $0x238] sm:$0xff]
    %v306 = vld [vmem:[%s1 + $0x258] sm:$0xff]
    %v307 = vld [vmem:[%s1 + $0x278] sm:$0xff]
    %v308 = vld [vmem:[%s1 + $0x298] sm:$0xff]
    %v309 = vld [vmem:[%s1 + $0x2b8] sm:$0xff]
    %v310 = vld [vmem:[%s1 + $0x2d8] sm:$0xff]
    %v311 = vld [vmem:[%s1 + $0x2f8] sm:$0xff]
    %v312 = vld [vmem:[%s1 + $0x318] sm:$0xff]
    %v313 = vld [vmem:[%s1 + $0x338] sm:$0xff]
    %v314 = vld [vmem:[%s1 + $0x358] sm:$0xff]
    %v315 = vld [vmem:[%s1 + $0x378] sm:$0xff]
    %v316 = vld [vmem:[%s1 + $0x398] sm:$0xff]
    %v317 = vld [vmem:[%s1 + $0x3b8] sm:$0xff]
    %v318 = vld [vmem:[%s1 + $0x3d8] sm:$0xff]
    %v319 = vld [vmem:[%s1 + $0x3f8] sm:$0xff]
    %v320 = vstv %s287
    %v321 = vmul.f32 %v320, %v288
    %v322 = vmul.f32 %v320, %v289
    %v323 = vmul.f32 %v320, %v290
    %v324 = vmul.f32 %v320, %v291
    %v325 = vmul.f32 %v320, %v292
    %v326 = vmul.f32 %v320, %v293
    %v327 = vmul.f32 %v320, %v294
    %v328 = vmul.f32 %v320, %v295
    %v329 = vmul.f32 %v320, %v296
    %v330 = vmul.f32 %v320, %v297
    %v331 = vmul.f32 %v320, %v298
    %v332 = vmul.f32 %v320, %v299
    %v333 = vmul.f32 %v320, %v300
    %v334 = vmul.f32 %v320, %v301
    %v335 = vmul.f32 %v320, %v302
    %v336 = vmul.f32 %v320, %v303
    %v337 = vmul.f32 %v320, %v304
    %v338 = vmul.f32 %v320, %v305
    %v339 = vmul.f32 %v320, %v306
    %v340 = vmul.f32 %v320, %v307
    %v341 = vmul.f32 %v320, %v308
    %v342 = vmul.f32 %v320, %v309
    %v343 = vmul.f32 %v320, %v310
    %v344 = vmul.f32 %v320, %v311
    %v345 = vmul.f32 %v320, %v312
    %v346 = vmul.f32 %v320, %v313
    %v347 = vmul.f32 %v320, %v314
    %v348 = vmul.f32 %v320, %v315
    %v349 = vmul.f32 %v320, %v316
    %v350 = vmul.f32 %v320, %v317
    %v351 = vmul.f32 %v320, %v318
    %v352 = vmul.f32 %v320, %v319
    %v353 = vadd.f32 %v255, %v321
    %v354 = vadd.f32 %v256, %v322
    %v355 = vadd.f32 %v257, %v323
    %v356 = vadd.f32 %v258, %v324
    %v357 = vadd.f32 %v259, %v325
    %v358 = vadd.f32 %v260, %v326
    %v359 = vadd.f32 %v261, %v327
    %v360 = vadd.f32 %v262, %v328
    %v361 = vadd.f32 %v263, %v329
    %v362 = vadd.f32 %v264, %v330
    %v363 = vadd.f32 %v265, %v331
    %v364 = vadd.f32 %v266, %v332
    %v365 = vadd.f32 %v267, %v333
    %v366 = vadd.f32 %v268, %v334
    %v367 = vadd.f32 %v269, %v335
    %v368 = vadd.f32 %v270, %v336
    %v369 = vadd.f32 %v271, %v337
    %v370 = vadd.f32 %v272, %v338
    %v371 = vadd.f32 %v273, %v339
    %v372 = vadd.f32 %v274, %v340
    %v373 = vadd.f32 %v275, %v341
    %v374 = vadd.f32 %v276, %v342
    %v375 = vadd.f32 %v277, %v343
    %v376 = vadd.f32 %v278, %v344
    %v377 = vadd.f32 %v279, %v345
    %v378 = vadd.f32 %v280, %v346
    %v379 = vadd.f32 %v281, %v347
    %v380 = vadd.f32 %v282, %v348
    %v381 = vadd.f32 %v283, %v349
    %v382 = vadd.f32 %v284, %v350
    %v383 = vadd.f32 %v285, %v351
    %v384 = vadd.f32 %v286, %v352
    %385 = vst [vmem:[#allocation5] sm:$0xff] %v353
    %386 = vst [vmem:[#allocation5 + $0x8] sm:$0xff] %v354
    %387 = vst [vmem:[#allocation5 + $0x10] sm:$0xff] %v355
    %388 = vst [vmem:[#allocation5 + $0x18] sm:$0xff] %v356
    %389 = vst [vmem:[#allocation5 + $0x20] sm:$0xff] %v357
    %390 = vst [vmem:[#allocation5 + $0x28] sm:$0xff] %v358
    %391 = vst [vmem:[#allocation5 + $0x30] sm:$0xff] %v359
    %392 = vst [vmem:[#allocation5 + $0x38] sm:$0xff] %v360
    %393 = vst [vmem:[#allocation5 + $0x40] sm:$0xff] %v361
    %394 = vst [vmem:[#allocation5 + $0x48] sm:$0xff] %v362
    %395 = vst [vmem:[#allocation5 + $0x50] sm:$0xff] %v363
    %396 = vst [vmem:[#allocation5 + $0x58] sm:$0xff] %v364
    %397 = vst [vmem:[#allocation5 + $0x60] sm:$0xff] %v365
    %398 = vst [vmem:[#allocation5 + $0x68] sm:$0xff] %v366
    %399 = vst [vmem:[#allocation5 + $0x70] sm:$0xff] %v367
    %400 = vst [vmem:[#allocation5 + $0x78] sm:$0xff] %v368
    %401 = vst [vmem:[#allocation5 + $0x80] sm:$0xff] %v369
    %402 = vst [vmem:[#allocation5 + $0x88] sm:$0xff] %v370
    %403 = vst [vmem:[#allocation5 + $0x90] sm:$0xff] %v371
    %404 = vst [vmem:[#allocation5 + $0x98] sm:$0xff] %v372
    %405 = vst [vmem:[#allocation5 + $0xa0] sm:$0xff] %v373
    %406 = vst [vmem:[#allocation5 + $0xa8] sm:$0xff] %v374
    %407 = vst [vmem:[#allocation5 + $0xb0] sm:$0xff] %v375
    %408 = vst [vmem:[#allocation5 + $0xb8] sm:$0xff] %v376
    %409 = vst [vmem:[#allocation5 + $0xc0] sm:$0xff] %v377
    %410 = vst [vmem:[#allocation5 + $0xc8] sm:$0xff] %v378
    %411 = vst [vmem:[#allocation5 + $0xd0] sm:$0xff] %v379
    %412 = vst [vmem:[#allocation5 + $0xd8] sm:$0xff] %v380
    %413 = vst [vmem:[#allocation5 + $0xe0] sm:$0xff] %v381
    %414 = vst [vmem:[#allocation5 + $0xe8] sm:$0xff] %v382
    %415 = vst [vmem:[#allocation5 + $0xf0] sm:$0xff] %v383
    %416 = vst [vmem:[#allocation5 + $0xf8] sm:$0xff] %v384
    // Predicated region
    $region14: #{semantic_attention_forward.3} parent=1 // pred_check
      _
    $region15: #{semantic_attention_forward.3} parent=1 // pred_check_branch
      %418 = sbr.rel (0) target = $region17
    $region16: #{semantic_attention_forward.3} parent=1 // pred_region
      %s420 = ssub.s32 4096, 4096
      %421 = vsyncadd [#allocation3], %s420
      %s422 = sshll.u32 [#allocation5], 4
      %s423 = int_to_ptr.vmem [resolvable:$true] %s422
      %428 = dma.vmem_to_hbm [thread:$0]  %s423, 4096, %s2, [#allocation3], 128, 128, 8
    $region17: #{semantic_attention_forward.3} parent=1 // pred_fallthru
      _
    // Predicated region
    $region18: #{semantic_attention_forward.3} parent=1 // pred_check
      _
    $region19: #{semantic_attention_forward.3} parent=1 // pred_check_branch
      %430 = sbr.rel (0) target = $region21
    $region20: #{semantic_attention_forward.3} parent=1 // pred_region
      %431 = dma.done [#allocation3], 4096
    $region21: #{semantic_attention_forward.3} parent=1 // pred_fallthru
      _
    %432 = vsyncpa [#allocation3], 1
    %433 = vsyncpa [#allocation4], 1

</llo_original>
